<compile_context>
chip_gen: v7x
topology: tpu7x:2x2x1
jax: 0.10.0
libtpu: 0.0.40
codegen_flags: <defaults>
</compile_context>

<pallas_src>
import numpy as np

import jax
import jax.numpy as jnp
from jax.experimental import pallas as pl
from jax.experimental.pallas import tpu as pltpu


# ----------------------------------------------------------------------------
# Single fused Pallas kernel: 4 conv blocks + fused (adv|aux) head
# ----------------------------------------------------------------------------
def _discriminator_kernel(a0_ref,
                          s1_ref, m1_ref, e1_ref,
                          s2_ref, m2_ref, e2_ref,
                          s3_ref, m3_ref, e3_ref,
                          s4_ref, m4_ref, e4_ref,
                          wh_ref, bh_ref,
                          adv_ref, aux_ref):
    def conv_block(a, s_ref, m_ref, e_ref):
        # a: (B*H, W*Cin) activation in the 2-D layout (f32 or bf16).
        a_bf = a.astype(jnp.bfloat16)
        rows = s_ref.shape[1]          # B * Ho
        cols = m_ref.shape[2]          # Wo * Cout
        acc = jnp.zeros((rows, cols), jnp.float32)
        for kh in range(3):            # static unroll over the 3 kernel rows
            sel = jnp.dot(s_ref[kh], a_bf, preferred_element_type=jnp.float32)
            acc = acc + jnp.dot(sel.astype(jnp.bfloat16), m_ref[kh],
                                preferred_element_type=jnp.float32)
        z = acc + e_ref[0:1, :]                    # conv bias (per-channel, tiled)
        z = jnp.where(z > 0, z, 0.2 * z)           # LeakyReLU(0.2)
        # TODO(synk): Dropout2d(0.25) has no deterministic forward; eval-mode identity.
        z = z * e_ref[1:2, :] + e_ref[2:3, :]      # BatchNorm2d (eval) / identity
        return z                                   # f32

    a = a0_ref[...]                                # (B*H0, W0*C0) bf16
    a = conv_block(a, s1_ref, m1_ref, e1_ref)
    a = conv_block(a, s2_ref, m2_ref, e2_ref)
    a = conv_block(a, s3_ref, m3_ref, e3_ref)
    a = conv_block(a, s4_ref, m4_ref, e4_ref)      # (B, 128) with ds_size == 1

    # Fused heads: one (B, F) @ (F, 1 + 15) matmul on the MXU.
    feat = a.astype(jnp.bfloat16)
    logits = jnp.dot(feat, wh_ref[...], preferred_element_type=jnp.float32) + bh_ref[...]
    adv = logits[:, 0:1]
    adv_ref[...] = pl.reciprocal(1.0 + jnp.exp(-adv), approx=False)   # exact Sigmoid
    aux_ref[...] = logits[:, 1:]


# ----------------------------------------------------------------------------
# pallas_call wrapper (single invocation, whole-array VMEM blocks)
# ----------------------------------------------------------------------------
def _full_spec(shape):
    return pl.BlockSpec(shape, lambda i: (0,) * len(shape))


def discriminator_pallas(a0, params, batch):
    blocks = params["blocks"]
    wh, bh = params["wh"], params["bh"]

    inputs = [a0]
    in_specs = [_full_spec(a0.shape)]
    flops = 0
    for blk in blocks:
        for name in ("s", "m", "e"):
            arr = blk[name]
            inputs.append(arr)
            in_specs.append(_full_spec(arr.shape))
        _, r_s, c_s = blk["s"].shape       # (3, B*Ho, B*H)
        _, k_m, n_m = blk["m"].shape       # (3, W*Cin, Wo*Cout)
        flops += 3 * (2 * r_s * c_s * k_m + 2 * r_s * k_m * n_m)
    inputs += [wh, bh]
    in_specs += [_full_spec(wh.shape), _full_spec(bh.shape)]
    flops += 2 * batch * wh.shape[0] * wh.shape[1]

    n_aux = wh.shape[1] - 1
    bytes_accessed = int(sum(x.size * x.dtype.itemsize for x in inputs)
                         + batch * (1 + n_aux) * 4)

    out_shape = (jax.ShapeDtypeStruct((batch, 1), jnp.float32),
                 jax.ShapeDtypeStruct((batch, n_aux), jnp.float32))
    out_specs = (_full_spec((batch, 1)), _full_spec((batch, n_aux)))

    return pl.pallas_call(
        _discriminator_kernel,
        out_shape=out_shape,
        grid=(1,),
        in_specs=in_specs,
        out_specs=out_specs,
        compiler_params=pltpu.CompilerParams(dimension_semantics=("arbitrary",)),
        cost_estimate=pl.CostEstimate(flops=int(flops),
                                      transcendentals=int(batch),
                                      bytes_accessed=bytes_accessed),
    )(*inputs)


# ----------------------------------------------------------------------------
# Init-time lowering of Conv2d(k=3, s=2, p=1) to the (S, M) matmul pair
# ----------------------------------------------------------------------------
def _conv_as_matmuls(w_oihw, B, H, W, Ci, Co):
    """A_out = sum_kh (S[kh] @ A_in) @ M[kh] on the (B*H, W*Ci) layout."""
    Ho, Wo = H // 2, W // 2
    S = np.zeros((3, B * Ho, B * H), np.float32)
    M = np.zeros((3, W * Ci, Wo * Co), np.float32)
    for kh in range(3):
        for b in range(B):
            for i in range(Ho):
                r = 2 * i + kh - 1                      # stride-2 + pad along H
                if 0 <= r < H:
                    S[kh, b * Ho + i, b * H + r] = 1.0
        for kw in range(3):
            for j in range(Wo):
                c = 2 * j + kw - 1                      # stride-2 + pad along W
                if 0 <= c < W:
                    # M[kh, c*Ci + ci, j*Co + co] = w[co, ci, kh, kw]
                    M[kh, c * Ci:(c + 1) * Ci, j * Co:(j + 1) * Co] = \
                        w_oihw[:, :, kh, kw].T
    return S, M


# ----------------------------------------------------------------------------
# Parameter initialization (deterministic, synthetic — mirrors module shapes)
# ----------------------------------------------------------------------------
def init_params(key, img_size, channels, batch):
    assert img_size // 2 ** 4 == 1, "fused kernel assumes ds_size == 1 (img_size == 16)"
    # TODO(synk): ds_size > 1 would need the NCHW-flatten permutation folded into
    # the head weights plus a row-group merge; not implemented here.
    ks = iter(jax.random.split(key, 32))
    blocks = []
    in_c, H = channels, img_size
    for out_c, bn in ((16, False), (32, True), (64, True), (128, True)):
        w = 0.02 * jax.random.normal(next(ks), (out_c, in_c, 3, 3), jnp.float32)  # N(0,0.02)
        b = 0.01 * jax.random.normal(next(ks), (out_c,), jnp.float32)
        if bn:
            gamma = 1.0 + 0.02 * jax.random.normal(next(ks), (out_c,), jnp.float32)  # N(1,0.02)
            beta = jnp.zeros((out_c,), jnp.float32)
            run_mean = jnp.zeros((out_c,), jnp.float32)
            run_var = jnp.ones((out_c,), jnp.float32)
            eps = 0.8  # nn.BatchNorm2d(out_filters, 0.8) passes 0.8 as eps (bug-compatible)
            scale = gamma / jnp.sqrt(run_var + eps)
            shift = beta - run_mean * scale
        else:
            scale = jnp.ones((out_c,), jnp.float32)
            shift = jnp.zeros((out_c,), jnp.float32)

        s_mats, m_mats = _conv_as_matmuls(np.asarray(w), batch, H, H, in_c, out_c)
        Wo = H // 2
        e = np.stack([np.tile(np.asarray(b), Wo),        # bias tiled over width
                      np.tile(np.asarray(scale), Wo),    # BN scale tiled
                      np.tile(np.asarray(shift), Wo)]).astype(np.float32)
        blocks.append(dict(s=jnp.asarray(s_mats, jnp.bfloat16),
                           m=jnp.asarray(m_mats, jnp.bfloat16),
                           e=jnp.asarray(e, jnp.float32)))
        in_c, H = out_c, H // 2

    feat = 128 * (img_size // 2 ** 4) ** 2
    wa = 0.05 * jax.random.normal(next(ks), (1, feat), jnp.float32)    # PyTorch (out, in)
    ba = jnp.zeros((1,), jnp.float32)
    wx = 0.05 * jax.random.normal(next(ks), (15, feat), jnp.float32)
    bx = jnp.zeros((15,), jnp.float32)
    wh = jnp.concatenate([wa, wx], axis=0).T.astype(jnp.bfloat16)      # (F, 16) = [adv|aux]
    bh = jnp.concatenate([ba, bx]).reshape(1, -1).astype(jnp.float32)  # (1, 16)
    return dict(blocks=blocks, wh=wh, bh=bh)


# ----------------------------------------------------------------------------
# Forward pass
# ----------------------------------------------------------------------------
@jax.jit
def discriminator_forward(img_nchw, params):
    B, C, H, W = img_nchw.shape
    # NCHW -> (B*H, W*C) layout (row = image row, col = (width, channel)); bf16 for MXU.
    a0 = jnp.transpose(img_nchw, (0, 2, 3, 1)).reshape(B * H, W * C).astype(jnp.bfloat16)
    validity, label = discriminator_pallas(a0, params, B)
    return validity, label


# ----------------------------------------------------------------------------
if __name__ == "__main__":
    img_size = 16
    channels = 4
    batch = 2

    key = jax.random.PRNGKey(0)
    k_img, k_par = jax.random.split(key)
    img = jax.random.normal(k_img, (batch, channels, img_size, img_size), jnp.float32)
    params = init_params(k_par, img_size, channels, batch)

    validity, label = discriminator_forward(img, params)
    jax.block_until_ready((validity, label))

    assert validity.shape == (batch, 1)
    assert label.shape == (batch, 15)
    assert bool(jnp.all((validity >= 0.0) & (validity <= 1.0)))
    print("KERNEL_OK")
</pallas_src>

<mosaic_0001>
module attributes {stable_mosaic.version = 11 : i64} {
  func.func @_discriminator_kernel(%arg0: i32, %arg1: memref<32x64xbf16, #tpu.memory_space<vmem>>, %arg2: memref<3x16x32xbf16, #tpu.memory_space<vmem>>, %arg3: memref<3x64x128xbf16, #tpu.memory_space<vmem>>, %arg4: memref<3x128xf32, #tpu.memory_space<vmem>>, %arg5: memref<3x8x16xbf16, #tpu.memory_space<vmem>>, %arg6: memref<3x128x128xbf16, #tpu.memory_space<vmem>>, %arg7: memref<3x128xf32, #tpu.memory_space<vmem>>, %arg8: memref<3x4x8xbf16, #tpu.memory_space<vmem>>, %arg9: memref<3x128x128xbf16, #tpu.memory_space<vmem>>, %arg10: memref<3x128xf32, #tpu.memory_space<vmem>>, %arg11: memref<3x2x4xbf16, #tpu.memory_space<vmem>>, %arg12: memref<3x128x128xbf16, #tpu.memory_space<vmem>>, %arg13: memref<3x128xf32, #tpu.memory_space<vmem>>, %arg14: memref<128x16xbf16, #tpu.memory_space<vmem>>, %arg15: memref<1x16xf32, #tpu.memory_space<vmem>>, %arg16: memref<2x1xf32, #tpu.memory_space<vmem>>, %arg17: memref<2x15xf32, #tpu.memory_space<vmem>>) attributes {dimension_semantics = [#tpu.dimension_semantics<arbitrary>], iteration_bounds = array<i64: 1>, scalar_prefetch = 0 : i64, scratch_operands = 0 : i64, tpu.core_type = #tpu.core_type<tc>, window_params = [{pipeline_mode = #tpu.pipeline_mode<synchronous>, transform_indices = @transform_0, window_bounds = array<i64: 32, 64>}, {pipeline_mode = #tpu.pipeline_mode<synchronous>, transform_indices = @transform_1, window_bounds = array<i64: 3, 16, 32>}, {pipeline_mode = #tpu.pipeline_mode<synchronous>, transform_indices = @transform_2, window_bounds = array<i64: 3, 64, 128>}, {pipeline_mode = #tpu.pipeline_mode<synchronous>, transform_indices = @transform_3, window_bounds = array<i64: 3, 128>}, {pipeline_mode = #tpu.pipeline_mode<synchronous>, transform_indices = @transform_4, window_bounds = array<i64: 3, 8, 16>}, {pipeline_mode = #tpu.pipeline_mode<synchronous>, transform_indices = @transform_5, window_bounds = array<i64: 3, 128, 128>}, {pipeline_mode = #tpu.pipeline_mode<synchronous>, transform_indices = @transform_6, window_bounds = array<i64: 3, 128>}, {pipeline_mode = #tpu.pipeline_mode<synchronous>, transform_indices = @transform_7, window_bounds = array<i64: 3, 4, 8>}, {pipeline_mode = #tpu.pipeline_mode<synchronous>, transform_indices = @transform_8, window_bounds = array<i64: 3, 128, 128>}, {pipeline_mode = #tpu.pipeline_mode<synchronous>, transform_indices = @transform_9, window_bounds = array<i64: 3, 128>}, {pipeline_mode = #tpu.pipeline_mode<synchronous>, transform_indices = @transform_10, window_bounds = array<i64: 3, 2, 4>}, {pipeline_mode = #tpu.pipeline_mode<synchronous>, transform_indices = @transform_11, window_bounds = array<i64: 3, 128, 128>}, {pipeline_mode = #tpu.pipeline_mode<synchronous>, transform_indices = @transform_12, window_bounds = array<i64: 3, 128>}, {pipeline_mode = #tpu.pipeline_mode<synchronous>, transform_indices = @transform_13, window_bounds = array<i64: 128, 16>}, {pipeline_mode = #tpu.pipeline_mode<synchronous>, transform_indices = @transform_14, window_bounds = array<i64: 1, 16>}, {pipeline_mode = #tpu.pipeline_mode<synchronous>, transform_indices = @transform_15, window_bounds = array<i64: 2, 1>}, {pipeline_mode = #tpu.pipeline_mode<synchronous>, transform_indices = @transform_16, window_bounds = array<i64: 2, 15>}]} {
    %c0 = arith.constant 0 : index
    %c0_0 = arith.constant 0 : index
    %0 = vector.load %arg1[%c0, %c0_0] : memref<32x64xbf16, #tpu.memory_space<vmem>>, vector<32x64xbf16>
    %cst = arith.constant 0.000000e+00 : f32
    %1 = vector.broadcast %cst : f32 to vector<16x128xf32>
    %c0_1 = arith.constant 0 : index
    %c0_2 = arith.constant 0 : index
    %c0_3 = arith.constant 0 : index
    %2 = vector.load %arg2[%c0_1, %c0_2, %c0_3] : memref<3x16x32xbf16, #tpu.memory_space<vmem>>, vector<1x16x32xbf16>
    %3 = vector.shape_cast %2 : vector<1x16x32xbf16> to vector<16x32xbf16>
    %cst_4 = arith.constant dense<0.000000e+00> : vector<16x64xf32>
    %4 = tpu.matmul %3, %0, %cst_4 {dimension_numbers = #tpu.dot_dimension_numbers<[1], [0], [0], [1], [0, 0, 1, 1], [], []>} : vector<16x32xbf16>, vector<32x64xbf16>, vector<16x64xf32> -> vector<16x64xf32>
    %5 = arith.truncf %4 : vector<16x64xf32> to vector<16x64xbf16>
    %c0_5 = arith.constant 0 : index
    %c0_6 = arith.constant 0 : index
    %c0_7 = arith.constant 0 : index
    %6 = vector.load %arg3[%c0_5, %c0_6, %c0_7] : memref<3x64x128xbf16, #tpu.memory_space<vmem>>, vector<1x64x128xbf16>
    %7 = vector.shape_cast %6 : vector<1x64x128xbf16> to vector<64x128xbf16>
    %cst_8 = arith.constant dense<0.000000e+00> : vector<16x128xf32>
    %8 = tpu.matmul %5, %7, %cst_8 {dimension_numbers = #tpu.dot_dimension_numbers<[1], [0], [0], [1], [0, 0, 1, 1], [], []>} : vector<16x64xbf16>, vector<64x128xbf16>, vector<16x128xf32> -> vector<16x128xf32>
    %9 = arith.addf %1, %8 : vector<16x128xf32>
    %c1 = arith.constant 1 : index
    %c0_9 = arith.constant 0 : index
    %c0_10 = arith.constant 0 : index
    %10 = vector.load %arg2[%c1, %c0_9, %c0_10] : memref<3x16x32xbf16, #tpu.memory_space<vmem>>, vector<1x16x32xbf16>
    %11 = vector.shape_cast %10 : vector<1x16x32xbf16> to vector<16x32xbf16>
    %cst_11 = arith.constant dense<0.000000e+00> : vector<16x64xf32>
    %12 = tpu.matmul %11, %0, %cst_11 {dimension_numbers = #tpu.dot_dimension_numbers<[1], [0], [0], [1], [0, 0, 1, 1], [], []>} : vector<16x32xbf16>, vector<32x64xbf16>, vector<16x64xf32> -> vector<16x64xf32>
    %13 = arith.truncf %12 : vector<16x64xf32> to vector<16x64xbf16>
    %c1_12 = arith.constant 1 : index
    %c0_13 = arith.constant 0 : index
    %c0_14 = arith.constant 0 : index
    %14 = vector.load %arg3[%c1_12, %c0_13, %c0_14] : memref<3x64x128xbf16, #tpu.memory_space<vmem>>, vector<1x64x128xbf16>
    %15 = vector.shape_cast %14 : vector<1x64x128xbf16> to vector<64x128xbf16>
    %cst_15 = arith.constant dense<0.000000e+00> : vector<16x128xf32>
    %16 = tpu.matmul %13, %15, %cst_15 {dimension_numbers = #tpu.dot_dimension_numbers<[1], [0], [0], [1], [0, 0, 1, 1], [], []>} : vector<16x64xbf16>, vector<64x128xbf16>, vector<16x128xf32> -> vector<16x128xf32>
    %17 = arith.addf %9, %16 : vector<16x128xf32>
    %c2 = arith.constant 2 : index
    %c0_16 = arith.constant 0 : index
    %c0_17 = arith.constant 0 : index
    %18 = vector.load %arg2[%c2, %c0_16, %c0_17] : memref<3x16x32xbf16, #tpu.memory_space<vmem>>, vector<1x16x32xbf16>
    %19 = vector.shape_cast %18 : vector<1x16x32xbf16> to vector<16x32xbf16>
    %cst_18 = arith.constant dense<0.000000e+00> : vector<16x64xf32>
    %20 = tpu.matmul %19, %0, %cst_18 {dimension_numbers = #tpu.dot_dimension_numbers<[1], [0], [0], [1], [0, 0, 1, 1], [], []>} : vector<16x32xbf16>, vector<32x64xbf16>, vector<16x64xf32> -> vector<16x64xf32>
    %21 = arith.truncf %20 : vector<16x64xf32> to vector<16x64xbf16>
    %c2_19 = arith.constant 2 : index
    %c0_20 = arith.constant 0 : index
    %c0_21 = arith.constant 0 : index
    %22 = vector.load %arg3[%c2_19, %c0_20, %c0_21] : memref<3x64x128xbf16, #tpu.memory_space<vmem>>, vector<1x64x128xbf16>
    %23 = vector.shape_cast %22 : vector<1x64x128xbf16> to vector<64x128xbf16>
    %cst_22 = arith.constant dense<0.000000e+00> : vector<16x128xf32>
    %24 = tpu.matmul %21, %23, %cst_22 {dimension_numbers = #tpu.dot_dimension_numbers<[1], [0], [0], [1], [0, 0, 1, 1], [], []>} : vector<16x64xbf16>, vector<64x128xbf16>, vector<16x128xf32> -> vector<16x128xf32>
    %25 = arith.addf %17, %24 : vector<16x128xf32>
    %c0_23 = arith.constant 0 : index
    %c0_24 = arith.constant 0 : index
    %26 = vector.load %arg4[%c0_23, %c0_24] : memref<3x128xf32, #tpu.memory_space<vmem>>, vector<1x128xf32>
    %27 = vector.broadcast %26 : vector<1x128xf32> to vector<16x128xf32>
    %28 = arith.addf %25, %27 : vector<16x128xf32>
    %cst_25 = arith.constant 0.000000e+00 : f32
    %29 = vector.broadcast %cst_25 : f32 to vector<16x128xf32>
    %30 = arith.cmpf ogt, %28, %29 : vector<16x128xf32>
    %cst_26 = arith.constant 2.000000e-01 : f32
    %31 = vector.broadcast %cst_26 : f32 to vector<16x128xf32>
    %32 = arith.mulf %31, %28 : vector<16x128xf32>
    %33 = arith.select %30, %28, %32 : vector<16x128xi1>, vector<16x128xf32>
    %c1_27 = arith.constant 1 : index
    %c0_28 = arith.constant 0 : index
    %34 = vector.load %arg4[%c1_27, %c0_28] : memref<3x128xf32, #tpu.memory_space<vmem>>, vector<1x128xf32>
    %35 = vector.broadcast %34 : vector<1x128xf32> to vector<16x128xf32>
    %36 = arith.mulf %33, %35 : vector<16x128xf32>
    %c2_29 = arith.constant 2 : index
    %c0_30 = arith.constant 0 : index
    %37 = vector.load %arg4[%c2_29, %c0_30] : memref<3x128xf32, #tpu.memory_space<vmem>>, vector<1x128xf32>
    %38 = vector.broadcast %37 : vector<1x128xf32> to vector<16x128xf32>
    %39 = arith.addf %36, %38 : vector<16x128xf32>
    %40 = arith.truncf %39 : vector<16x128xf32> to vector<16x128xbf16>
    %cst_31 = arith.constant 0.000000e+00 : f32
    %41 = vector.broadcast %cst_31 : f32 to vector<8x128xf32>
    %c0_32 = arith.constant 0 : index
    %c0_33 = arith.constant 0 : index
    %c0_34 = arith.constant 0 : index
    %42 = vector.load %arg5[%c0_32, %c0_33, %c0_34] : memref<3x8x16xbf16, #tpu.memory_space<vmem>>, vector<1x8x16xbf16>
    %43 = vector.shape_cast %42 : vector<1x8x16xbf16> to vector<8x16xbf16>
    %cst_35 = arith.constant dense<0.000000e+00> : vector<8x128xf32>
    %44 = tpu.matmul %43, %40, %cst_35 {dimension_numbers = #tpu.dot_dimension_numbers<[1], [0], [0], [1], [0, 0, 1, 1], [], []>} : vector<8x16xbf16>, vector<16x128xbf16>, vector<8x128xf32> -> vector<8x128xf32>
    %45 = arith.truncf %44 : vector<8x128xf32> to vector<8x128xbf16>
    %c0_36 = arith.constant 0 : index
    %c0_37 = arith.constant 0 : index
    %c0_38 = arith.constant 0 : index
    %46 = vector.load %arg6[%c0_36, %c0_37, %c0_38] : memref<3x128x128xbf16, #tpu.memory_space<vmem>>, vector<1x128x128xbf16>
    %47 = vector.shape_cast %46 : vector<1x128x128xbf16> to vector<128x128xbf16>
    %cst_39 = arith.constant dense<0.000000e+00> : vector<8x128xf32>
    %48 = tpu.matmul %45, %47, %cst_39 {dimension_numbers = #tpu.dot_dimension_numbers<[1], [0], [0], [1], [0, 0, 1, 1], [], []>} : vector<8x128xbf16>, vector<128x128xbf16>, vector<8x128xf32> -> vector<8x128xf32>
    %49 = arith.addf %41, %48 : vector<8x128xf32>
    %c1_40 = arith.constant 1 : index
    %c0_41 = arith.constant 0 : index
    %c0_42 = arith.constant 0 : index
    %50 = vector.load %arg5[%c1_40, %c0_41, %c0_42] : memref<3x8x16xbf16, #tpu.memory_space<vmem>>, vector<1x8x16xbf16>
    %51 = vector.shape_cast %50 : vector<1x8x16xbf16> to vector<8x16xbf16>
    %cst_43 = arith.constant dense<0.000000e+00> : vector<8x128xf32>
    %52 = tpu.matmul %51, %40, %cst_43 {dimension_numbers = #tpu.dot_dimension_numbers<[1], [0], [0], [1], [0, 0, 1, 1], [], []>} : vector<8x16xbf16>, vector<16x128xbf16>, vector<8x128xf32> -> vector<8x128xf32>
    %53 = arith.truncf %52 : vector<8x128xf32> to vector<8x128xbf16>
    %c1_44 = arith.constant 1 : index
    %c0_45 = arith.constant 0 : index
    %c0_46 = arith.constant 0 : index
    %54 = vector.load %arg6[%c1_44, %c0_45, %c0_46] : memref<3x128x128xbf16, #tpu.memory_space<vmem>>, vector<1x128x128xbf16>
    %55 = vector.shape_cast %54 : vector<1x128x128xbf16> to vector<128x128xbf16>
    %cst_47 = arith.constant dense<0.000000e+00> : vector<8x128xf32>
    %56 = tpu.matmul %53, %55, %cst_47 {dimension_numbers = #tpu.dot_dimension_numbers<[1], [0], [0], [1], [0, 0, 1, 1], [], []>} : vector<8x128xbf16>, vector<128x128xbf16>, vector<8x128xf32> -> vector<8x128xf32>
    %57 = arith.addf %49, %56 : vector<8x128xf32>
    %c2_48 = arith.constant 2 : index
    %c0_49 = arith.constant 0 : index
    %c0_50 = arith.constant 0 : index
    %58 = vector.load %arg5[%c2_48, %c0_49, %c0_50] : memref<3x8x16xbf16, #tpu.memory_space<vmem>>, vector<1x8x16xbf16>
    %59 = vector.shape_cast %58 : vector<1x8x16xbf16> to vector<8x16xbf16>
    %cst_51 = arith.constant dense<0.000000e+00> : vector<8x128xf32>
    %60 = tpu.matmul %59, %40, %cst_51 {dimension_numbers = #tpu.dot_dimension_numbers<[1], [0], [0], [1], [0, 0, 1, 1], [], []>} : vector<8x16xbf16>, vector<16x128xbf16>, vector<8x128xf32> -> vector<8x128xf32>
    %61 = arith.truncf %60 : vector<8x128xf32> to vector<8x128xbf16>
    %c2_52 = arith.constant 2 : index
    %c0_53 = arith.constant 0 : index
    %c0_54 = arith.constant 0 : index
    %62 = vector.load %arg6[%c2_52, %c0_53, %c0_54] : memref<3x128x128xbf16, #tpu.memory_space<vmem>>, vector<1x128x128xbf16>
    %63 = vector.shape_cast %62 : vector<1x128x128xbf16> to vector<128x128xbf16>
    %cst_55 = arith.constant dense<0.000000e+00> : vector<8x128xf32>
    %64 = tpu.matmul %61, %63, %cst_55 {dimension_numbers = #tpu.dot_dimension_numbers<[1], [0], [0], [1], [0, 0, 1, 1], [], []>} : vector<8x128xbf16>, vector<128x128xbf16>, vector<8x128xf32> -> vector<8x128xf32>
    %65 = arith.addf %57, %64 : vector<8x128xf32>
    %c0_56 = arith.constant 0 : index
    %c0_57 = arith.constant 0 : index
    %66 = vector.load %arg7[%c0_56, %c0_57] : memref<3x128xf32, #tpu.memory_space<vmem>>, vector<1x128xf32>
    %67 = vector.broadcast %66 : vector<1x128xf32> to vector<8x128xf32>
    %68 = arith.addf %65, %67 : vector<8x128xf32>
    %cst_58 = arith.constant 0.000000e+00 : f32
    %69 = vector.broadcast %cst_58 : f32 to vector<8x128xf32>
    %70 = arith.cmpf ogt, %68, %69 : vector<8x128xf32>
    %cst_59 = arith.constant 2.000000e-01 : f32
    %71 = vector.broadcast %cst_59 : f32 to vector<8x128xf32>
    %72 = arith.mulf %71, %68 : vector<8x128xf32>
    %73 = arith.select %70, %68, %72 : vector<8x128xi1>, vector<8x128xf32>
    %c1_60 = arith.constant 1 : index
    %c0_61 = arith.constant 0 : index
    %74 = vector.load %arg7[%c1_60, %c0_61] : memref<3x128xf32, #tpu.memory_space<vmem>>, vector<1x128xf32>
    %75 = vector.broadcast %74 : vector<1x128xf32> to vector<8x128xf32>
    %76 = arith.mulf %73, %75 : vector<8x128xf32>
    %c2_62 = arith.constant 2 : index
    %c0_63 = arith.constant 0 : index
    %77 = vector.load %arg7[%c2_62, %c0_63] : memref<3x128xf32, #tpu.memory_space<vmem>>, vector<1x128xf32>
    %78 = vector.broadcast %77 : vector<1x128xf32> to vector<8x128xf32>
    %79 = arith.addf %76, %78 : vector<8x128xf32>
    %80 = arith.truncf %79 : vector<8x128xf32> to vector<8x128xbf16>
    %cst_64 = arith.constant 0.000000e+00 : f32
    %81 = vector.broadcast %cst_64 : f32 to vector<4x128xf32>
    %c0_65 = arith.constant 0 : index
    %c0_66 = arith.constant 0 : index
    %c0_67 = arith.constant 0 : index
    %82 = vector.load %arg8[%c0_65, %c0_66, %c0_67] : memref<3x4x8xbf16, #tpu.memory_space<vmem>>, vector<1x4x8xbf16>
    %83 = vector.shape_cast %82 : vector<1x4x8xbf16> to vector<4x8xbf16>
    %cst_68 = arith.constant dense<0.000000e+00> : vector<4x128xf32>
    %84 = tpu.matmul %83, %80, %cst_68 {dimension_numbers = #tpu.dot_dimension_numbers<[1], [0], [0], [1], [0, 0, 1, 1], [], []>} : vector<4x8xbf16>, vector<8x128xbf16>, vector<4x128xf32> -> vector<4x128xf32>
    %85 = arith.truncf %84 : vector<4x128xf32> to vector<4x128xbf16>
    %c0_69 = arith.constant 0 : index
    %c0_70 = arith.constant 0 : index
    %c0_71 = arith.constant 0 : index
    %86 = vector.load %arg9[%c0_69, %c0_70, %c0_71] : memref<3x128x128xbf16, #tpu.memory_space<vmem>>, vector<1x128x128xbf16>
    %87 = vector.shape_cast %86 : vector<1x128x128xbf16> to vector<128x128xbf16>
    %cst_72 = arith.constant dense<0.000000e+00> : vector<4x128xf32>
    %88 = tpu.matmul %85, %87, %cst_72 {dimension_numbers = #tpu.dot_dimension_numbers<[1], [0], [0], [1], [0, 0, 1, 1], [], []>} : vector<4x128xbf16>, vector<128x128xbf16>, vector<4x128xf32> -> vector<4x128xf32>
    %89 = arith.addf %81, %88 : vector<4x128xf32>
    %c1_73 = arith.constant 1 : index
    %c0_74 = arith.constant 0 : index
    %c0_75 = arith.constant 0 : index
    %90 = vector.load %arg8[%c1_73, %c0_74, %c0_75] : memref<3x4x8xbf16, #tpu.memory_space<vmem>>, vector<1x4x8xbf16>
    %91 = vector.shape_cast %90 : vector<1x4x8xbf16> to vector<4x8xbf16>
    %cst_76 = arith.constant dense<0.000000e+00> : vector<4x128xf32>
    %92 = tpu.matmul %91, %80, %cst_76 {dimension_numbers = #tpu.dot_dimension_numbers<[1], [0], [0], [1], [0, 0, 1, 1], [], []>} : vector<4x8xbf16>, vector<8x128xbf16>, vector<4x128xf32> -> vector<4x128xf32>
    %93 = arith.truncf %92 : vector<4x128xf32> to vector<4x128xbf16>
    %c1_77 = arith.constant 1 : index
    %c0_78 = arith.constant 0 : index
    %c0_79 = arith.constant 0 : index
    %94 = vector.load %arg9[%c1_77, %c0_78, %c0_79] : memref<3x128x128xbf16, #tpu.memory_space<vmem>>, vector<1x128x128xbf16>
    %95 = vector.shape_cast %94 : vector<1x128x128xbf16> to vector<128x128xbf16>
    %cst_80 = arith.constant dense<0.000000e+00> : vector<4x128xf32>
    %96 = tpu.matmul %93, %95, %cst_80 {dimension_numbers = #tpu.dot_dimension_numbers<[1], [0], [0], [1], [0, 0, 1, 1], [], []>} : vector<4x128xbf16>, vector<128x128xbf16>, vector<4x128xf32> -> vector<4x128xf32>
    %97 = arith.addf %89, %96 : vector<4x128xf32>
    %c2_81 = arith.constant 2 : index
    %c0_82 = arith.constant 0 : index
    %c0_83 = arith.constant 0 : index
    %98 = vector.load %arg8[%c2_81, %c0_82, %c0_83] : memref<3x4x8xbf16, #tpu.memory_space<vmem>>, vector<1x4x8xbf16>
    %99 = vector.shape_cast %98 : vector<1x4x8xbf16> to vector<4x8xbf16>
    %cst_84 = arith.constant dense<0.000000e+00> : vector<4x128xf32>
    %100 = tpu.matmul %99, %80, %cst_84 {dimension_numbers = #tpu.dot_dimension_numbers<[1], [0], [0], [1], [0, 0, 1, 1], [], []>} : vector<4x8xbf16>, vector<8x128xbf16>, vector<4x128xf32> -> vector<4x128xf32>
    %101 = arith.truncf %100 : vector<4x128xf32> to vector<4x128xbf16>
    %c2_85 = arith.constant 2 : index
    %c0_86 = arith.constant 0 : index
    %c0_87 = arith.constant 0 : index
    %102 = vector.load %arg9[%c2_85, %c0_86, %c0_87] : memref<3x128x128xbf16, #tpu.memory_space<vmem>>, vector<1x128x128xbf16>
    %103 = vector.shape_cast %102 : vector<1x128x128xbf16> to vector<128x128xbf16>
    %cst_88 = arith.constant dense<0.000000e+00> : vector<4x128xf32>
    %104 = tpu.matmul %101, %103, %cst_88 {dimension_numbers = #tpu.dot_dimension_numbers<[1], [0], [0], [1], [0, 0, 1, 1], [], []>} : vector<4x128xbf16>, vector<128x128xbf16>, vector<4x128xf32> -> vector<4x128xf32>
    %105 = arith.addf %97, %104 : vector<4x128xf32>
    %c0_89 = arith.constant 0 : index
    %c0_90 = arith.constant 0 : index
    %106 = vector.load %arg10[%c0_89, %c0_90] : memref<3x128xf32, #tpu.memory_space<vmem>>, vector<1x128xf32>
    %107 = vector.broadcast %106 : vector<1x128xf32> to vector<4x128xf32>
    %108 = arith.addf %105, %107 : vector<4x128xf32>
    %cst_91 = arith.constant 0.000000e+00 : f32
    %109 = vector.broadcast %cst_91 : f32 to vector<4x128xf32>
    %110 = arith.cmpf ogt, %108, %109 : vector<4x128xf32>
    %cst_92 = arith.constant 2.000000e-01 : f32
    %111 = vector.broadcast %cst_92 : f32 to vector<4x128xf32>
    %112 = arith.mulf %111, %108 : vector<4x128xf32>
    %113 = arith.select %110, %108, %112 : vector<4x128xi1>, vector<4x128xf32>
    %c1_93 = arith.constant 1 : index
    %c0_94 = arith.constant 0 : index
    %114 = vector.load %arg10[%c1_93, %c0_94] : memref<3x128xf32, #tpu.memory_space<vmem>>, vector<1x128xf32>
    %115 = vector.broadcast %114 : vector<1x128xf32> to vector<4x128xf32>
    %116 = arith.mulf %113, %115 : vector<4x128xf32>
    %c2_95 = arith.constant 2 : index
    %c0_96 = arith.constant 0 : index
    %117 = vector.load %arg10[%c2_95, %c0_96] : memref<3x128xf32, #tpu.memory_space<vmem>>, vector<1x128xf32>
    %118 = vector.broadcast %117 : vector<1x128xf32> to vector<4x128xf32>
    %119 = arith.addf %116, %118 : vector<4x128xf32>
    %120 = arith.truncf %119 : vector<4x128xf32> to vector<4x128xbf16>
    %cst_97 = arith.constant 0.000000e+00 : f32
    %121 = vector.broadcast %cst_97 : f32 to vector<2x128xf32>
    %c0_98 = arith.constant 0 : index
    %c0_99 = arith.constant 0 : index
    %c0_100 = arith.constant 0 : index
    %122 = vector.load %arg11[%c0_98, %c0_99, %c0_100] : memref<3x2x4xbf16, #tpu.memory_space<vmem>>, vector<1x2x4xbf16>
    %123 = vector.shape_cast %122 : vector<1x2x4xbf16> to vector<2x4xbf16>
    %cst_101 = arith.constant dense<0.000000e+00> : vector<2x128xf32>
    %124 = tpu.matmul %123, %120, %cst_101 {dimension_numbers = #tpu.dot_dimension_numbers<[1], [0], [0], [1], [0, 0, 1, 1], [], []>} : vector<2x4xbf16>, vector<4x128xbf16>, vector<2x128xf32> -> vector<2x128xf32>
    %125 = arith.truncf %124 : vector<2x128xf32> to vector<2x128xbf16>
    %c0_102 = arith.constant 0 : index
    %c0_103 = arith.constant 0 : index
    %c0_104 = arith.constant 0 : index
    %126 = vector.load %arg12[%c0_102, %c0_103, %c0_104] : memref<3x128x128xbf16, #tpu.memory_space<vmem>>, vector<1x128x128xbf16>
    %127 = vector.shape_cast %126 : vector<1x128x128xbf16> to vector<128x128xbf16>
    %cst_105 = arith.constant dense<0.000000e+00> : vector<2x128xf32>
    %128 = tpu.matmul %125, %127, %cst_105 {dimension_numbers = #tpu.dot_dimension_numbers<[1], [0], [0], [1], [0, 0, 1, 1], [], []>} : vector<2x128xbf16>, vector<128x128xbf16>, vector<2x128xf32> -> vector<2x128xf32>
    %129 = arith.addf %121, %128 : vector<2x128xf32>
    %c1_106 = arith.constant 1 : index
    %c0_107 = arith.constant 0 : index
    %c0_108 = arith.constant 0 : index
    %130 = vector.load %arg11[%c1_106, %c0_107, %c0_108] : memref<3x2x4xbf16, #tpu.memory_space<vmem>>, vector<1x2x4xbf16>
    %131 = vector.shape_cast %130 : vector<1x2x4xbf16> to vector<2x4xbf16>
    %cst_109 = arith.constant dense<0.000000e+00> : vector<2x128xf32>
    %132 = tpu.matmul %131, %120, %cst_109 {dimension_numbers = #tpu.dot_dimension_numbers<[1], [0], [0], [1], [0, 0, 1, 1], [], []>} : vector<2x4xbf16>, vector<4x128xbf16>, vector<2x128xf32> -> vector<2x128xf32>
    %133 = arith.truncf %132 : vector<2x128xf32> to vector<2x128xbf16>
    %c1_110 = arith.constant 1 : index
    %c0_111 = arith.constant 0 : index
    %c0_112 = arith.constant 0 : index
    %134 = vector.load %arg12[%c1_110, %c0_111, %c0_112] : memref<3x128x128xbf16, #tpu.memory_space<vmem>>, vector<1x128x128xbf16>
    %135 = vector.shape_cast %134 : vector<1x128x128xbf16> to vector<128x128xbf16>
    %cst_113 = arith.constant dense<0.000000e+00> : vector<2x128xf32>
    %136 = tpu.matmul %133, %135, %cst_113 {dimension_numbers = #tpu.dot_dimension_numbers<[1], [0], [0], [1], [0, 0, 1, 1], [], []>} : vector<2x128xbf16>, vector<128x128xbf16>, vector<2x128xf32> -> vector<2x128xf32>
    %137 = arith.addf %129, %136 : vector<2x128xf32>
    %c2_114 = arith.constant 2 : index
    %c0_115 = arith.constant 0 : index
    %c0_116 = arith.constant 0 : index
    %138 = vector.load %arg11[%c2_114, %c0_115, %c0_116] : memref<3x2x4xbf16, #tpu.memory_space<vmem>>, vector<1x2x4xbf16>
    %139 = vector.shape_cast %138 : vector<1x2x4xbf16> to vector<2x4xbf16>
    %cst_117 = arith.constant dense<0.000000e+00> : vector<2x128xf32>
    %140 = tpu.matmul %139, %120, %cst_117 {dimension_numbers = #tpu.dot_dimension_numbers<[1], [0], [0], [1], [0, 0, 1, 1], [], []>} : vector<2x4xbf16>, vector<4x128xbf16>, vector<2x128xf32> -> vector<2x128xf32>
    %141 = arith.truncf %140 : vector<2x128xf32> to vector<2x128xbf16>
    %c2_118 = arith.constant 2 : index
    %c0_119 = arith.constant 0 : index
    %c0_120 = arith.constant 0 : index
    %142 = vector.load %arg12[%c2_118, %c0_119, %c0_120] : memref<3x128x128xbf16, #tpu.memory_space<vmem>>, vector<1x128x128xbf16>
    %143 = vector.shape_cast %142 : vector<1x128x128xbf16> to vector<128x128xbf16>
    %cst_121 = arith.constant dense<0.000000e+00> : vector<2x128xf32>
    %144 = tpu.matmul %141, %143, %cst_121 {dimension_numbers = #tpu.dot_dimension_numbers<[1], [0], [0], [1], [0, 0, 1, 1], [], []>} : vector<2x128xbf16>, vector<128x128xbf16>, vector<2x128xf32> -> vector<2x128xf32>
    %145 = arith.addf %137, %144 : vector<2x128xf32>
    %c0_122 = arith.constant 0 : index
    %c0_123 = arith.constant 0 : index
    %146 = vector.load %arg13[%c0_122, %c0_123] : memref<3x128xf32, #tpu.memory_space<vmem>>, vector<1x128xf32>
    %147 = vector.broadcast %146 : vector<1x128xf32> to vector<2x128xf32>
    %148 = arith.addf %145, %147 : vector<2x128xf32>
    %cst_124 = arith.constant 0.000000e+00 : f32
    %149 = vector.broadcast %cst_124 : f32 to vector<2x128xf32>
    %150 = arith.cmpf ogt, %148, %149 : vector<2x128xf32>
    %cst_125 = arith.constant 2.000000e-01 : f32
    %151 = vector.broadcast %cst_125 : f32 to vector<2x128xf32>
    %152 = arith.mulf %151, %148 : vector<2x128xf32>
    %153 = arith.select %150, %148, %152 : vector<2x128xi1>, vector<2x128xf32>
    %c1_126 = arith.constant 1 : index
    %c0_127 = arith.constant 0 : index
    %154 = vector.load %arg13[%c1_126, %c0_127] : memref<3x128xf32, #tpu.memory_space<vmem>>, vector<1x128xf32>
    %155 = vector.broadcast %154 : vector<1x128xf32> to vector<2x128xf32>
    %156 = arith.mulf %153, %155 : vector<2x128xf32>
    %c2_128 = arith.constant 2 : index
    %c0_129 = arith.constant 0 : index
    %157 = vector.load %arg13[%c2_128, %c0_129] : memref<3x128xf32, #tpu.memory_space<vmem>>, vector<1x128xf32>
    %158 = vector.broadcast %157 : vector<1x128xf32> to vector<2x128xf32>
    %159 = arith.addf %156, %158 : vector<2x128xf32>
    %160 = arith.truncf %159 : vector<2x128xf32> to vector<2x128xbf16>
    %c0_130 = arith.constant 0 : index
    %c0_131 = arith.constant 0 : index
    %161 = vector.load %arg14[%c0_130, %c0_131] : memref<128x16xbf16, #tpu.memory_space<vmem>>, vector<128x16xbf16>
    %cst_132 = arith.constant dense<0.000000e+00> : vector<2x16xf32>
    %162 = tpu.matmul %160, %161, %cst_132 {dimension_numbers = #tpu.dot_dimension_numbers<[1], [0], [0], [1], [0, 0, 1, 1], [], []>} : vector<2x128xbf16>, vector<128x16xbf16>, vector<2x16xf32> -> vector<2x16xf32>
    %c0_133 = arith.constant 0 : index
    %c0_134 = arith.constant 0 : index
    %163 = vector.load %arg15[%c0_133, %c0_134] : memref<1x16xf32, #tpu.memory_space<vmem>>, vector<1x16xf32>
    %164 = vector.broadcast %163 : vector<1x16xf32> to vector<2x16xf32>
    %165 = arith.addf %162, %164 : vector<2x16xf32>
    %166 = vector.extract_strided_slice %165 {offsets = [0, 0], sizes = [2, 1], strides = [1, 1]} : vector<2x16xf32> to vector<2x1xf32>
    %cst_135 = arith.constant 0.000000e+00 : f32
    %167 = vector.broadcast %cst_135 : f32 to vector<2x1xf32>
    %168 = arith.subf %167, %166 : vector<2x1xf32>
    %169 = math.exp %168 : vector<2x1xf32>
    %cst_136 = arith.constant 1.000000e+00 : f32
    %170 = vector.broadcast %cst_136 : f32 to vector<2x1xf32>
    %171 = arith.addf %170, %169 : vector<2x1xf32>
    %172 = tpu.reciprocal %171 : vector<2x1xf32> -> vector<2x1xf32>
    %c0_137 = arith.constant 0 : index
    %c0_138 = arith.constant 0 : index
    %173 = vector.load %arg16[%c0_137, %c0_138] : memref<2x1xf32, #tpu.memory_space<vmem>>, vector<2x1xf32>
    tpu.vector_store %arg16[%c0_137, %c0_138], %172 {strides = array<i32>} : memref<2x1xf32, #tpu.memory_space<vmem>>, vector<2x1xf32>,
    %174 = vector.extract_strided_slice %165 {offsets = [0, 1], sizes = [2, 15], strides = [1, 1]} : vector<2x16xf32> to vector<2x15xf32>
    %c0_139 = arith.constant 0 : index
    %c0_140 = arith.constant 0 : index
    %175 = vector.load %arg17[%c0_139, %c0_140] : memref<2x15xf32, #tpu.memory_space<vmem>>, vector<2x15xf32>
    tpu.vector_store %arg17[%c0_139, %c0_140], %174 {strides = array<i32>} : memref<2x15xf32, #tpu.memory_space<vmem>>, vector<2x15xf32>,
    return
  }
  func.func @transform_0(%arg0: i32) -> (i32, i32) {
    %c0_i32 = arith.constant 0 : i32
    %c0_i32_0 = arith.constant 0 : i32
    %c0_i32_1 = arith.constant 0 : i32
    return %c0_i32, %c0_i32_0 : i32, i32
  }
  func.func @transform_1(%arg0: i32) -> (i32, i32, i32) {
    %c0_i32 = arith.constant 0 : i32
    %c0_i32_0 = arith.constant 0 : i32
    %c0_i32_1 = arith.constant 0 : i32
    %c0_i32_2 = arith.constant 0 : i32
    return %c0_i32, %c0_i32_0, %c0_i32_1 : i32, i32, i32
  }
  func.func @transform_2(%arg0: i32) -> (i32, i32, i32) {
    %c0_i32 = arith.constant 0 : i32
    %c0_i32_0 = arith.constant 0 : i32
    %c0_i32_1 = arith.constant 0 : i32
    %c0_i32_2 = arith.constant 0 : i32
    return %c0_i32, %c0_i32_0, %c0_i32_1 : i32, i32, i32
  }
  func.func @transform_3(%arg0: i32) -> (i32, i32) {
    %c0_i32 = arith.constant 0 : i32
    %c0_i32_0 = arith.constant 0 : i32
    %c0_i32_1 = arith.constant 0 : i32
    return %c0_i32, %c0_i32_0 : i32, i32
  }
  func.func @transform_4(%arg0: i32) -> (i32, i32, i32) {
    %c0_i32 = arith.constant 0 : i32
    %c0_i32_0 = arith.constant 0 : i32
    %c0_i32_1 = arith.constant 0 : i32
    %c0_i32_2 = arith.constant 0 : i32
    return %c0_i32, %c0_i32_0, %c0_i32_1 : i32, i32, i32
  }
  func.func @transform_5(%arg0: i32) -> (i32, i32, i32) {
    %c0_i32 = arith.constant 0 : i32
    %c0_i32_0 = arith.constant 0 : i32
    %c0_i32_1 = arith.constant 0 : i32
    %c0_i32_2 = arith.constant 0 : i32
    return %c0_i32, %c0_i32_0, %c0_i32_1 : i32, i32, i32
  }
  func.func @transform_6(%arg0: i32) -> (i32, i32) {
    %c0_i32 = arith.constant 0 : i32
    %c0_i32_0 = arith.constant 0 : i32
    %c0_i32_1 = arith.constant 0 : i32
    return %c0_i32, %c0_i32_0 : i32, i32
  }
  func.func @transform_7(%arg0: i32) -> (i32, i32, i32) {
    %c0_i32 = arith.constant 0 : i32
    %c0_i32_0 = arith.constant 0 : i32
    %c0_i32_1 = arith.constant 0 : i32
    %c0_i32_2 = arith.constant 0 : i32
    return %c0_i32, %c0_i32_0, %c0_i32_1 : i32, i32, i32
  }
  func.func @transform_8(%arg0: i32) -> (i32, i32, i32) {
    %c0_i32 = arith.constant 0 : i32
    %c0_i32_0 = arith.constant 0 : i32
    %c0_i32_1 = arith.constant 0 : i32
    %c0_i32_2 = arith.constant 0 : i32
    return %c0_i32, %c0_i32_0, %c0_i32_1 : i32, i32, i32
  }
  func.func @transform_9(%arg0: i32) -> (i32, i32) {
    %c0_i32 = arith.constant 0 : i32
    %c0_i32_0 = arith.constant 0 : i32
    %c0_i32_1 = arith.constant 0 : i32
    return %c0_i32, %c0_i32_0 : i32, i32
  }
  func.func @transform_10(%arg0: i32) -> (i32, i32, i32) {
    %c0_i32 = arith.constant 0 : i32
    %c0_i32_0 = arith.constant 0 : i32
    %c0_i32_1 = arith.constant 0 : i32
    %c0_i32_2 = arith.constant 0 : i32
    return %c0_i32, %c0_i32_0, %c0_i32_1 : i32, i32, i32
  }
  func.func @transform_11(%arg0: i32) -> (i32, i32, i32) {
    %c0_i32 = arith.constant 0 : i32
    %c0_i32_0 = arith.constant 0 : i32
    %c0_i32_1 = arith.constant 0 : i32
    %c0_i32_2 = arith.constant 0 : i32
    return %c0_i32, %c0_i32_0, %c0_i32_1 : i32, i32, i32
  }
  func.func @transform_12(%arg0: i32) -> (i32, i32) {
    %c0_i32 = arith.constant 0 : i32
    %c0_i32_0 = arith.constant 0 : i32
    %c0_i32_1 = arith.constant 0 : i32
    return %c0_i32, %c0_i32_0 : i32, i32
  }
  func.func @transform_13(%arg0: i32) -> (i32, i32) {
    %c0_i32 = arith.constant 0 : i32
    %c0_i32_0 = arith.constant 0 : i32
    %c0_i32_1 = arith.constant 0 : i32
    return %c0_i32, %c0_i32_0 : i32, i32
  }
  func.func @transform_14(%arg0: i32) -> (i32, i32) {
    %c0_i32 = arith.constant 0 : i32
    %c0_i32_0 = arith.constant 0 : i32
    %c0_i32_1 = arith.constant 0 : i32
    return %c0_i32, %c0_i32_0 : i32, i32
  }
  func.func @transform_15(%arg0: i32) -> (i32, i32) {
    %c0_i32 = arith.constant 0 : i32
    %c0_i32_0 = arith.constant 0 : i32
    %c0_i32_1 = arith.constant 0 : i32
    return %c0_i32, %c0_i32_0 : i32, i32
  }
  func.func @transform_16(%arg0: i32) -> (i32, i32) {
    %c0_i32 = arith.constant 0 : i32
    %c0_i32_0 = arith.constant 0 : i32
    %c0_i32_1 = arith.constant 0 : i32
    return %c0_i32, %c0_i32_0 : i32, i32
  }
}

</mosaic_0001>

<llo_original>
// kernel: discriminator_forward.1
$region0: #{discriminator_forward.1}
  #allocation0 [shape = 'u32[]', space=smem, size = 0x4, offset = 0x4, fixed_abs, tag = 'smem constant byte address 0x4 - core index']
  #allocation1 [shape = 'u32[144,128]{1,0:T(1,128)}', space=vmem, size = 0x12000, scoped, tag = 'internal scratch']
  %s0 = inlined_call_operand.vmem [shape: bf16[32,64], index: 0, kind: input, shape index: {}]
  %s1 = inlined_call_operand.hbm [shape: bf16[3,16,32], index: 1, kind: input, shape index: {}]
  %s2 = inlined_call_operand.hbm [shape: bf16[3,64,128], index: 2, kind: input, shape index: {}]
  %s3 = inlined_call_operand.vmem [shape: f32[3,128], index: 3, kind: input, shape index: {}]
  %s4 = inlined_call_operand.hbm [shape: bf16[3,8,16], index: 4, kind: input, shape index: {}]
  %s5 = inlined_call_operand.vmem [shape: bf16[3,128,128], index: 5, kind: input, shape index: {}]
  %s6 = inlined_call_operand.hbm [shape: f32[3,128], index: 6, kind: input, shape index: {}]
  %s7 = inlined_call_operand.hbm [shape: bf16[3,4,8], index: 7, kind: input, shape index: {}]
  %s8 = inlined_call_operand.vmem [shape: bf16[3,128,128], index: 8, kind: input, shape index: {}]
  %s9 = inlined_call_operand.hbm [shape: f32[3,128], index: 9, kind: input, shape index: {}]
  %s10 = inlined_call_operand.hbm [shape: bf16[3,2,4], index: 10, kind: input, shape index: {}]
  %s11 = inlined_call_operand.vmem [shape: bf16[3,128,128], index: 11, kind: input, shape index: {}]
  %s12 = inlined_call_operand.hbm [shape: f32[3,128], index: 12, kind: input, shape index: {}]
  %s13 = inlined_call_operand.vmem [shape: bf16[128,16], index: 13, kind: input, shape index: {}]
  %s14 = inlined_call_operand.hbm [shape: f32[1,16], index: 14, kind: input, shape index: {}]
  %s15 = inlined_call_operand.vmem [shape: f32[2,1], index: 15, kind: output, shape index: {0}]
  %s16 = inlined_call_operand.hbm [shape: f32[2,15], index: 16, kind: output, shape index: {1}]
  %17 = xla_tuple %s15, %s16
  %s18 = sld [smem:[#allocation0]]
  $region114: #{discriminator_forward.1} parent=0
    _
  %s20 = ssub.s32 1, %s18
  %s21 = scalar_select 0, %s20, %s18
  $region1: #{discriminator_forward.1} parent=0
    #allocation2 [shape = 'u8[12288]{0}', space=vmem, size = 0x3000, scoped, tag = 'input window, operand 1, single buffered']
    #allocation3 [shape = 's32[1]{0}', space=sflag, size = 0x4, scoped, tag = 'scoped memory for discriminator_forward.1']
    #allocation4 [shape = 's32[1]{0}', space=sflag, size = 0x4, scoped, tag = 'scoped memory for discriminator_forward.1']
    #allocation5 [shape = 'u8[49152]{0}', space=vmem, size = 0xc000, scoped, tag = 'input window, operand 2, single buffered']
    #allocation6 [shape = 's32[1]{0}', space=sflag, size = 0x4, scoped, tag = 'scoped memory for discriminator_forward.1']
    #allocation7 [shape = 'u8[6144]{0}', space=vmem, size = 0x1800, scoped, tag = 'input window, operand 4, single buffered']
    #allocation8 [shape = 'u8[2048]{0}', space=vmem, size = 0x800, scoped, tag = 'input window, operand 6, single buffered']
    #allocation9 [shape = 's32[1]{0}', space=sflag, size = 0x4, scoped, tag = 'scoped memory for discriminator_forward.1']
    #allocation10 [shape = 'u8[3072]{0}', space=vmem, size = 0xc00, scoped, tag = 'input window, operand 7, single buffered']
    #allocation11 [shape = 'u8[2048]{0}', space=vmem, size = 0x800, scoped, tag = 'input window, operand 9, single buffered']
    #allocation12 [shape = 's32[1]{0}', space=sflag, size = 0x4, scoped, tag = 'scoped memory for discriminator_forward.1']
    #allocation13 [shape = 'u8[1536]{0}', space=vmem, size = 0x800, scoped, tag = 'input window, operand 10, single buffered']
    #allocation14 [shape = 'u8[2048]{0}', space=vmem, size = 0x800, scoped, tag = 'input window, operand 12, single buffered']
    #allocation15 [shape = 's32[1]{0}', space=sflag, size = 0x4, scoped, tag = 'scoped memory for discriminator_forward.1']
    #allocation16 [shape = 'u8[512]{0}', space=vmem, size = 0x400, scoped, tag = 'input window, operand 14, single buffered']
    #allocation17 [shape = 'u8[1024]{0}', space=vmem, size = 0x400, scoped, tag = 'output window, operand 1, single buffered']
    %22 = vsyncpa [#allocation3], 0
    %23 = vsyncpa [#allocation6], 0
    %24 = vsyncpa [#allocation9], 0
    %25 = vsyncpa [#allocation12], 0
    %26 = vsyncpa [#allocation15], 0
    %27 = vsyncpa [#allocation4], 0
    // Predicated region
    $region2: #{discriminator_forward.1} parent=1 // pred_check
      _
    $region3: #{discriminator_forward.1} parent=1 // pred_check_branch
      %29 = sbr.rel (0) target = $region5
    $region4: #{discriminator_forward.1} parent=1 // pred_region
      _
    $region5: #{discriminator_forward.1} parent=1 // pred_fallthru
      _
    // Predicated region
    $region6: #{discriminator_forward.1} parent=1 // pred_check
      _
    $region7: #{discriminator_forward.1} parent=1 // pred_check_branch
      %31 = sbr.rel (0) target = $region9
    $region8: #{discriminator_forward.1} parent=1 // pred_region
      %s33 = ssub.s32 384, 384
      %34 = vsyncadd [#allocation3], %s33
      %s35 = sshll.u32 [#allocation2], 4
      %s36 = int_to_ptr.vmem [resolvable:$true] %s35
      %41 = dma.hbm_to_vmem [thread:$0]  %s1, 384, %s36, [#allocation3], 64, 64, 4
    $region9: #{discriminator_forward.1} parent=1 // pred_fallthru
      _
    // Predicated region
    $region10: #{discriminator_forward.1} parent=1 // pred_check
      _
    $region11: #{discriminator_forward.1} parent=1 // pred_check_branch
      %43 = sbr.rel (0) target = $region13
    $region12: #{discriminator_forward.1} parent=1 // pred_region
      %s45 = ssub.s32 1536, 1536
      %46 = vsyncadd [#allocation6], %s45
      %s47 = sshll.u32 [#allocation5], 4
      %s48 = int_to_ptr.vmem [resolvable:$true] %s47
      %53 = dma.hbm_to_vmem [thread:$0]  %s2, 1536, %s48, [#allocation6], 64, 64, 4
    $region13: #{discriminator_forward.1} parent=1 // pred_fallthru
      _
    // Predicated region
    $region14: #{discriminator_forward.1} parent=1 // pred_check
      _
    $region15: #{discriminator_forward.1} parent=1 // pred_check_branch
      %55 = sbr.rel (0) target = $region17
    $region16: #{discriminator_forward.1} parent=1 // pred_region
      _
    $region17: #{discriminator_forward.1} parent=1 // pred_fallthru
      _
    // Predicated region
    $region18: #{discriminator_forward.1} parent=1 // pred_check
      _
    $region19: #{discriminator_forward.1} parent=1 // pred_check_branch
      %57 = sbr.rel (0) target = $region21
    $region20: #{discriminator_forward.1} parent=1 // pred_region
      %s59 = ssub.s32 192, 192
      %60 = vsyncadd [#allocation6], %s59
      %s61 = sshll.u32 [#allocation7], 4
      %s62 = int_to_ptr.vmem [resolvable:$true] %s61
      %67 = dma.hbm_to_vmem [thread:$0]  %s4, 192, %s62, [#allocation6], 64, 64, 4
    $region21: #{discriminator_forward.1} parent=1 // pred_fallthru
      _
    // Predicated region
    $region22: #{discriminator_forward.1} parent=1 // pred_check
      _
    $region23: #{discriminator_forward.1} parent=1 // pred_check_branch
      %69 = sbr.rel (0) target = $region25
    $region24: #{discriminator_forward.1} parent=1 // pred_region
      _
    $region25: #{discriminator_forward.1} parent=1 // pred_fallthru
      _
    // Predicated region
    $region26: #{discriminator_forward.1} parent=1 // pred_check
      _
    $region27: #{discriminator_forward.1} parent=1 // pred_check_branch
      %71 = sbr.rel (0) target = $region29
    $region28: #{discriminator_forward.1} parent=1 // pred_region
      %s73 = ssub.s32 64, 64
      %74 = vsyncadd [#allocation9], %s73
      %s76 = sshll.u32 [#allocation8], 4
      %s77 = int_to_ptr.vmem [resolvable:$true] %s76
      %79 = dma.hbm_to_vmem [thread:$0]  %s6, 64, %s77, [#allocation9]
    $region29: #{discriminator_forward.1} parent=1 // pred_fallthru
      _
    // Predicated region
    $region30: #{discriminator_forward.1} parent=1 // pred_check
      _
    $region31: #{discriminator_forward.1} parent=1 // pred_check_branch
      %81 = sbr.rel (0) target = $region33
    $region32: #{discriminator_forward.1} parent=1 // pred_region
      %s83 = ssub.s32 96, 96
      %84 = vsyncadd [#allocation9], %s83
      %s85 = sshll.u32 [#allocation10], 4
      %s86 = int_to_ptr.vmem [resolvable:$true] %s85
      %91 = dma.hbm_to_vmem [thread:$0]  %s7, 96, %s86, [#allocation9], 32, 32, 2
    $region33: #{discriminator_forward.1} parent=1 // pred_fallthru
      _
    // Predicated region
    $region34: #{discriminator_forward.1} parent=1 // pred_check
      _
    $region35: #{discriminator_forward.1} parent=1 // pred_check_branch
      %93 = sbr.rel (0) target = $region37
    $region36: #{discriminator_forward.1} parent=1 // pred_region
      _
    $region37: #{discriminator_forward.1} parent=1 // pred_fallthru
      _
    // Predicated region
    $region38: #{discriminator_forward.1} parent=1 // pred_check
      _
    $region39: #{discriminator_forward.1} parent=1 // pred_check_branch
      %95 = sbr.rel (0) target = $region41
    $region40: #{discriminator_forward.1} parent=1 // pred_region
      %s97 = ssub.s32 64, 64
      %98 = vsyncadd [#allocation12], %s97
      %s100 = sshll.u32 [#allocation11], 4
      %s101 = int_to_ptr.vmem [resolvable:$true] %s100
      %103 = dma.hbm_to_vmem [thread:$0]  %s9, 64, %s101, [#allocation12]
    $region41: #{discriminator_forward.1} parent=1 // pred_fallthru
      _
    // Predicated region
    $region42: #{discriminator_forward.1} parent=1 // pred_check
      _
    $region43: #{discriminator_forward.1} parent=1 // pred_check_branch
      %105 = sbr.rel (0) target = $region45
    $region44: #{discriminator_forward.1} parent=1 // pred_region
      %s107 = ssub.s32 48, 48
      %108 = vsyncadd [#allocation12], %s107
      %s109 = sshll.u32 [#allocation13], 4
      %s110 = int_to_ptr.vmem [resolvable:$true] %s109
      %115 = dma.hbm_to_vmem [thread:$0]  %s10, 48, %s110, [#allocation12], 16, 16, 1
    $region45: #{discriminator_forward.1} parent=1 // pred_fallthru
      _
    // Predicated region
    $region46: #{discriminator_forward.1} parent=1 // pred_check
      _
    $region47: #{discriminator_forward.1} parent=1 // pred_check_branch
      %117 = sbr.rel (0) target = $region49
    $region48: #{discriminator_forward.1} parent=1 // pred_region
      _
    $region49: #{discriminator_forward.1} parent=1 // pred_fallthru
      _
    // Predicated region
    $region50: #{discriminator_forward.1} parent=1 // pred_check
      _
    $region51: #{discriminator_forward.1} parent=1 // pred_check_branch
      %119 = sbr.rel (0) target = $region53
    $region52: #{discriminator_forward.1} parent=1 // pred_region
      %s121 = ssub.s32 64, 64
      %122 = vsyncadd [#allocation15], %s121
      %s124 = sshll.u32 [#allocation14], 4
      %s125 = int_to_ptr.vmem [resolvable:$true] %s124
      %127 = dma.hbm_to_vmem [thread:$0]  %s12, 64, %s125, [#allocation15]
    $region53: #{discriminator_forward.1} parent=1 // pred_fallthru
      _
    // Predicated region
    $region54: #{discriminator_forward.1} parent=1 // pred_check
      _
    $region55: #{discriminator_forward.1} parent=1 // pred_check_branch
      %129 = sbr.rel (0) target = $region57
    $region56: #{discriminator_forward.1} parent=1 // pred_region
      _
    $region57: #{discriminator_forward.1} parent=1 // pred_fallthru
      _
    // Predicated region
    $region58: #{discriminator_forward.1} parent=1 // pred_check
      _
    $region59: #{discriminator_forward.1} parent=1 // pred_check_branch
      %131 = sbr.rel (0) target = $region61
    $region60: #{discriminator_forward.1} parent=1 // pred_region
      %s133 = ssub.s32 16, 16
      %134 = vsyncadd [#allocation15], %s133
      %s136 = sshll.u32 [#allocation16], 4
      %s137 = int_to_ptr.vmem [resolvable:$true] %s136
      %139 = dma.hbm_to_vmem [thread:$0]  %s14, 16, %s137, [#allocation15]
    $region61: #{discriminator_forward.1} parent=1 // pred_fallthru
      _
    // Predicated region
    $region62: #{discriminator_forward.1} parent=1 // pred_check
      _
    $region63: #{discriminator_forward.1} parent=1 // pred_check_branch
      %141 = sbr.rel (0) target = $region65
    $region64: #{discriminator_forward.1} parent=1 // pred_region
      %142 = dma.done [#allocation3], 384
    $region65: #{discriminator_forward.1} parent=1 // pred_fallthru
      _
    // Predicated region
    $region66: #{discriminator_forward.1} parent=1 // pred_check
      _
    $region67: #{discriminator_forward.1} parent=1 // pred_check_branch
      %144 = sbr.rel (0) target = $region69
    $region68: #{discriminator_forward.1} parent=1 // pred_region
      %145 = dma.done [#allocation6], 1536
    $region69: #{discriminator_forward.1} parent=1 // pred_fallthru
      _
    // Predicated region
    $region70: #{discriminator_forward.1} parent=1 // pred_check
      _
    $region71: #{discriminator_forward.1} parent=1 // pred_check_branch
      %147 = sbr.rel (0) target = $region73
    $region72: #{discriminator_forward.1} parent=1 // pred_region
      %148 = dma.done [#allocation6], 192
    $region73: #{discriminator_forward.1} parent=1 // pred_fallthru
      _
    // Predicated region
    $region74: #{discriminator_forward.1} parent=1 // pred_check
      _
    $region75: #{discriminator_forward.1} parent=1 // pred_check_branch
      %150 = sbr.rel (0) target = $region77
    $region76: #{discriminator_forward.1} parent=1 // pred_region
      %151 = dma.done [#allocation9], 64
    $region77: #{discriminator_forward.1} parent=1 // pred_fallthru
      _
    // Predicated region
    $region78: #{discriminator_forward.1} parent=1 // pred_check
      _
    $region79: #{discriminator_forward.1} parent=1 // pred_check_branch
      %153 = sbr.rel (0) target = $region81
    $region80: #{discriminator_forward.1} parent=1 // pred_region
      %154 = dma.done [#allocation9], 96
    $region81: #{discriminator_forward.1} parent=1 // pred_fallthru
      _
    // Predicated region
    $region82: #{discriminator_forward.1} parent=1 // pred_check
      _
    $region83: #{discriminator_forward.1} parent=1 // pred_check_branch
      %156 = sbr.rel (0) target = $region85
    $region84: #{discriminator_forward.1} parent=1 // pred_region
      %157 = dma.done [#allocation12], 64
    $region85: #{discriminator_forward.1} parent=1 // pred_fallthru
      _
    // Predicated region
    $region86: #{discriminator_forward.1} parent=1 // pred_check
      _
    $region87: #{discriminator_forward.1} parent=1 // pred_check_branch
      %159 = sbr.rel (0) target = $region89
    $region88: #{discriminator_forward.1} parent=1 // pred_region
      %160 = dma.done [#allocation12], 48
    $region89: #{discriminator_forward.1} parent=1 // pred_fallthru
      _
    // Predicated region
    $region90: #{discriminator_forward.1} parent=1 // pred_check
      _
    $region91: #{discriminator_forward.1} parent=1 // pred_check_branch
      %162 = sbr.rel (0) target = $region93
    $region92: #{discriminator_forward.1} parent=1 // pred_region
      %163 = dma.done [#allocation15], 64
    $region93: #{discriminator_forward.1} parent=1 // pred_fallthru
      _
    // Predicated region
    $region94: #{discriminator_forward.1} parent=1 // pred_check
      _
    $region95: #{discriminator_forward.1} parent=1 // pred_check_branch
      %165 = sbr.rel (0) target = $region97
    $region96: #{discriminator_forward.1} parent=1 // pred_region
      %166 = dma.done [#allocation15], 16
    $region97: #{discriminator_forward.1} parent=1 // pred_fallthru
      _
    %v168 = vld [vmem:[%s0] sm:$0xf]
    %v169 = vld [vmem:[%s0 + $0x4] sm:$0xf]
    %v170 = vld [vmem:[%s0 + $0x8] sm:$0xf]
    %v171 = vld [vmem:[%s0 + $0xc] sm:$0xf]
    %v172 = vld [vmem:[#allocation2] sm:$0xf]
    %v173 = vld [vmem:[#allocation2 + $0x4] sm:$0xf]
    %v176 = vunpack.c.l.b16 %v172
    %v177 = vunpack.c.l.b16 %v173
    %v178 = vpack.c.b16 %v177, %v176
    %v183 = vunpack.c.l.b16 %v168
    %v184 = vunpack.c.l.b16 %v169
    %v185 = vunpack.c.l.b16 %v170
    %v186 = vunpack.c.l.b16 %v171
    %v187 = vpack.c.b16 %v184, %v183
    %v188 = vpack.c.b16 %v186, %v185
    %vm191 = vcmask 261120
    %v193 = vsel %vm191, %v178, 0
    %195 = vmatprep.subr.bf16.mxu0 0
    %196 = vmatpush1.bf16.msra.mxu0 %v187
    %197 = vmatprep.subr.bf16.mxu0 0
    %198 = vmatpush1.bf16.msra.mxu0 %v188
    %199 = vmatprep.subr.bf16.mxu0 0
    %200 = vmatpush1.bf16.msra.mxu0 0
    %201 = vmatprep.subr.bf16.mxu0 0
    %202 = vmatpush1.bf16.msra.mxu0 0
    %203 = vmatprep.subr.bf16.mxu0 0
    %204 = vmatpush1.bf16.msra.mxu0 0
    %205 = vmatprep.subr.bf16.mxu0 0
    %206 = vmatpush1.bf16.msra.mxu0 0
    %207 = vmatprep.subr.bf16.mxu0 0
    %208 = vmatpush1.bf16.msra.mxu0 0
    %209 = vmatprep.subr.bf16.mxu0 0
    %210 = vmatpush1.bf16.msra.mxu0 0
    %211 = vmatprep.subr.bf16.mxu0 0
    %212 = vmatpush1.bf16.msra.mxu0 0
    %213 = vmatprep.subr.bf16.mxu0 0
    %214 = vmatpush1.bf16.msra.mxu0 0
    %215 = vmatprep.subr.bf16.mxu0 0
    %216 = vmatpush1.bf16.msra.mxu0 0
    %217 = vmatprep.subr.bf16.mxu0 0
    %218 = vmatpush1.bf16.msra.mxu0 0
    %219 = vmatprep.subr.bf16.mxu0 0
    %220 = vmatpush1.bf16.msra.mxu0 0
    %221 = vmatprep.subr.bf16.mxu0 0
    %222 = vmatpush1.bf16.msra.mxu0 0
    %223 = vmatprep.subr.bf16.mxu0 0
    %224 = vmatpush1.bf16.msra.mxu0 0
    %225 = vmatprep.subr.bf16.mxu0 0
    %226 = vmatpush1.bf16.msra.mxu0 0
    %227 = vmatprep.mubr.bf16.mxu0 0
    %228 = vmatmul.mubr.bf16.gmra.mrb[0].mxu0 %v193
    %v229 = vpop.f32.mrb[0].mxu0
    %v230 = vadd.f32 0.0, %v229
    %v231 = vpop.f32.mrb[0].mxu0
    %v232 = vpop.f32.mrb[0].mxu0
    %v233 = vadd.f32 0.0, %v232
    %v234 = vpop.f32.mrb[0].mxu0
    %235 = vdwg.mxu0
    %v236 = vpack.c.bf16 %v233, %v230
    %v237 = vld [vmem:[#allocation5] sm:$0xf]
    %v238 = vld [vmem:[#allocation5 + $0x4] sm:$0xf]
    %v239 = vld [vmem:[#allocation5 + $0x8] sm:$0xf]
    %v240 = vld [vmem:[#allocation5 + $0xc] sm:$0xf]
    %v241 = vld [vmem:[#allocation5 + $0x10] sm:$0xf]
    %v242 = vld [vmem:[#allocation5 + $0x14] sm:$0xf]
    %v243 = vld [vmem:[#allocation5 + $0x18] sm:$0xf]
    %v244 = vld [vmem:[#allocation5 + $0x1c] sm:$0xf]
    %s245 = scalar_lea.vmem [#allocation2], 8
    %v246 = vld [vmem:[%s245] sm:$0xf]
    %v247 = vld [vmem:[%s245 + $0x4] sm:$0xf]
    %v250 = vunpack.c.l.b16 %v246
    %v251 = vunpack.c.l.b16 %v247
    %v252 = vpack.c.b16 %v251, %v250
    %v254 = vsel %vm191, %v252, 0
    %256 = vmatprep.subr.bf16.mxu0 0
    %257 = vmatpush1.bf16.msra.mxu0 %v187
    %258 = vmatprep.subr.bf16.mxu0 0
    %259 = vmatpush1.bf16.msra.mxu0 %v188
    %260 = vmatprep.subr.bf16.mxu0 0
    %261 = vmatpush1.bf16.msra.mxu0 0
    %262 = vmatprep.subr.bf16.mxu0 0
    %263 = vmatpush1.bf16.msra.mxu0 0
    %264 = vmatprep.subr.bf16.mxu0 0
    %265 = vmatpush1.bf16.msra.mxu0 0
    %266 = vmatprep.subr.bf16.mxu0 0
    %267 = vmatpush1.bf16.msra.mxu0 0
    %268 = vmatprep.subr.bf16.mxu0 0
    %269 = vmatpush1.bf16.msra.mxu0 0
    %270 = vmatprep.subr.bf16.mxu0 0
    %271 = vmatpush1.bf16.msra.mxu0 0
    %272 = vmatprep.subr.bf16.mxu0 0
    %273 = vmatpush1.bf16.msra.mxu0 0
    %274 = vmatprep.subr.bf16.mxu0 0
    %275 = vmatpush1.bf16.msra.mxu0 0
    %276 = vmatprep.subr.bf16.mxu0 0
    %277 = vmatpush1.bf16.msra.mxu0 0
    %278 = vmatprep.subr.bf16.mxu0 0
    %279 = vmatpush1.bf16.msra.mxu0 0
    %280 = vmatprep.subr.bf16.mxu0 0
    %281 = vmatpush1.bf16.msra.mxu0 0
    %282 = vmatprep.subr.bf16.mxu0 0
    %283 = vmatpush1.bf16.msra.mxu0 0
    %284 = vmatprep.subr.bf16.mxu0 0
    %285 = vmatpush1.bf16.msra.mxu0 0
    %286 = vmatprep.subr.bf16.mxu0 0
    %287 = vmatpush1.bf16.msra.mxu0 0
    %288 = vmatprep.mubr.bf16.mxu0 0
    %289 = vmatmul.mubr.bf16.gmra.mrb[0].mxu0 %v254
    %v290 = vpop.f32.mrb[0].mxu0
    %v291 = vadd.f32 0.0, %v290
    %v292 = vpop.f32.mrb[0].mxu0
    %v293 = vpop.f32.mrb[0].mxu0
    %v294 = vadd.f32 0.0, %v293
    %v295 = vpop.f32.mrb[0].mxu0
    %296 = vdwg.mxu0
    %v297 = vpack.c.bf16 %v294, %v291
    %s298 = scalar_lea.vmem [#allocation5], 32
    %v299 = vld [vmem:[%s298] sm:$0xf]
    %v300 = vld [vmem:[%s298 + $0x4] sm:$0xf]
    %v301 = vld [vmem:[%s298 + $0x8] sm:$0xf]
    %v302 = vld [vmem:[%s298 + $0xc] sm:$0xf]
    %v303 = vld [vmem:[%s298 + $0x10] sm:$0xf]
    %v304 = vld [vmem:[%s298 + $0x14] sm:$0xf]
    %v305 = vld [vmem:[%s298 + $0x18] sm:$0xf]
    %v306 = vld [vmem:[%s298 + $0x1c] sm:$0xf]
    %v315 = vunpack.c.l.b16 %v299
    %v316 = vunpack.c.l.b16 %v300
    %v317 = vunpack.c.l.b16 %v301
    %v318 = vunpack.c.l.b16 %v302
    %v319 = vunpack.c.l.b16 %v303
    %v320 = vunpack.c.l.b16 %v304
    %v321 = vunpack.c.l.b16 %v305
    %v322 = vunpack.c.l.b16 %v306
    %v323 = vpack.c.b16 %v316, %v315
    %v324 = vpack.c.b16 %v318, %v317
    %v325 = vpack.c.b16 %v320, %v319
    %v326 = vpack.c.b16 %v322, %v321
    %vm331 = vcmask 523264
    %v333 = vsel %vm331, %v297, 0
    %335 = vmatprep.subr.bf16.mxu0 0
    %336 = vmatpush1.bf16.msra.mxu0 %v323
    %337 = vmatprep.subr.bf16.mxu0 0
    %338 = vmatpush1.bf16.msra.mxu0 %v324
    %339 = vmatprep.subr.bf16.mxu0 0
    %340 = vmatpush1.bf16.msra.mxu0 %v325
    %341 = vmatprep.subr.bf16.mxu0 0
    %342 = vmatpush1.bf16.msra.mxu0 %v326
    %343 = vmatprep.subr.bf16.mxu0 0
    %344 = vmatpush1.bf16.msra.mxu0 0
    %345 = vmatprep.subr.bf16.mxu0 0
    %346 = vmatpush1.bf16.msra.mxu0 0
    %347 = vmatprep.subr.bf16.mxu0 0
    %348 = vmatpush1.bf16.msra.mxu0 0
    %349 = vmatprep.subr.bf16.mxu0 0
    %350 = vmatpush1.bf16.msra.mxu0 0
    %351 = vmatprep.subr.bf16.mxu0 0
    %352 = vmatpush1.bf16.msra.mxu0 0
    %353 = vmatprep.subr.bf16.mxu0 0
    %354 = vmatpush1.bf16.msra.mxu0 0
    %355 = vmatprep.subr.bf16.mxu0 0
    %356 = vmatpush1.bf16.msra.mxu0 0
    %357 = vmatprep.subr.bf16.mxu0 0
    %358 = vmatpush1.bf16.msra.mxu0 0
    %359 = vmatprep.subr.bf16.mxu0 0
    %360 = vmatpush1.bf16.msra.mxu0 0
    %361 = vmatprep.subr.bf16.mxu0 0
    %362 = vmatpush1.bf16.msra.mxu0 0
    %363 = vmatprep.subr.bf16.mxu0 0
    %364 = vmatpush1.bf16.msra.mxu0 0
    %365 = vmatprep.subr.bf16.mxu0 0
    %366 = vmatpush1.bf16.msra.mxu0 0
    %367 = vmatprep.mubr.bf16.mxu0 0
    %368 = vmatmul.mubr.bf16.gmra.mrb[0].mxu0 %v333
    %v369 = vpop.f32.mrb[0].mxu0
    %v370 = vadd.f32 0.0, %v369
    %v371 = vpop.f32.mrb[0].mxu0
    %v372 = vpop.f32.mrb[0].mxu0
    %v373 = vadd.f32 0.0, %v372
    %v374 = vpop.f32.mrb[0].mxu0
    %375 = vdwg.mxu0
    %v384 = vunpack.c.l.b16 %v237
    %v385 = vunpack.c.l.b16 %v238
    %v386 = vunpack.c.l.b16 %v239
    %v387 = vunpack.c.l.b16 %v240
    %v388 = vunpack.c.l.b16 %v241
    %v389 = vunpack.c.l.b16 %v242
    %v390 = vunpack.c.l.b16 %v243
    %v391 = vunpack.c.l.b16 %v244
    %v392 = vpack.c.b16 %v385, %v384
    %v393 = vpack.c.b16 %v387, %v386
    %v394 = vpack.c.b16 %v389, %v388
    %v395 = vpack.c.b16 %v391, %v390
    %v401 = vsel %vm331, %v236, 0
    %403 = vmatprep.subr.bf16.mxu0 0
    %404 = vmatpush1.bf16.msra.mxu0 %v392
    %405 = vmatprep.subr.bf16.mxu0 0
    %406 = vmatpush1.bf16.msra.mxu0 %v393
    %407 = vmatprep.subr.bf16.mxu0 0
    %408 = vmatpush1.bf16.msra.mxu0 %v394
    %409 = vmatprep.subr.bf16.mxu0 0
    %410 = vmatpush1.bf16.msra.mxu0 %v395
    %411 = vmatprep.subr.bf16.mxu0 0
    %412 = vmatpush1.bf16.msra.mxu0 0
    %413 = vmatprep.subr.bf16.mxu0 0
    %414 = vmatpush1.bf16.msra.mxu0 0
    %415 = vmatprep.subr.bf16.mxu0 0
    %416 = vmatpush1.bf16.msra.mxu0 0
    %417 = vmatprep.subr.bf16.mxu0 0
    %418 = vmatpush1.bf16.msra.mxu0 0
    %419 = vmatprep.subr.bf16.mxu0 0
    %420 = vmatpush1.bf16.msra.mxu0 0
    %421 = vmatprep.subr.bf16.mxu0 0
    %422 = vmatpush1.bf16.msra.mxu0 0
    %423 = vmatprep.subr.bf16.mxu0 0
    %424 = vmatpush1.bf16.msra.mxu0 0
    %425 = vmatprep.subr.bf16.mxu0 0
    %426 = vmatpush1.bf16.msra.mxu0 0
    %427 = vmatprep.subr.bf16.mxu0 0
    %428 = vmatpush1.bf16.msra.mxu0 0
    %429 = vmatprep.subr.bf16.mxu0 0
    %430 = vmatpush1.bf16.msra.mxu0 0
    %431 = vmatprep.subr.bf16.mxu0 0
    %432 = vmatpush1.bf16.msra.mxu0 0
    %433 = vmatprep.subr.bf16.mxu0 0
    %434 = vmatpush1.bf16.msra.mxu0 0
    %435 = vmatprep.mubr.bf16.mxu0 0
    %436 = vmatmul.mubr.bf16.gmra.mrb[0].mxu0 %v401
    %v437 = vpop.f32.mrb[0].mxu0
    %v438 = vadd.f32 %v370, %v437
    %v439 = vpop.f32.mrb[0].mxu0
    %v440 = vpop.f32.mrb[0].mxu0
    %v441 = vadd.f32 %v373, %v440
    %v442 = vpop.f32.mrb[0].mxu0
    %443 = vdwg.mxu0
    %s444 = scalar_lea.vmem [#allocation2], 16
    %v445 = vld [vmem:[%s444] sm:$0xf]
    %v446 = vld [vmem:[%s444 + $0x4] sm:$0xf]
    %v449 = vunpack.c.l.b16 %v445
    %v450 = vunpack.c.l.b16 %v446
    %v451 = vpack.c.b16 %v450, %v449
    %v453 = vsel %vm191, %v451, 0
    %455 = vmatprep.subr.bf16.mxu0 0
    %456 = vmatpush1.bf16.msra.mxu0 %v187
    %457 = vmatprep.subr.bf16.mxu0 0
    %458 = vmatpush1.bf16.msra.mxu0 %v188
    %459 = vmatprep.subr.bf16.mxu0 0
    %460 = vmatpush1.bf16.msra.mxu0 0
    %461 = vmatprep.subr.bf16.mxu0 0
    %462 = vmatpush1.bf16.msra.mxu0 0
    %463 = vmatprep.subr.bf16.mxu0 0
    %464 = vmatpush1.bf16.msra.mxu0 0
    %465 = vmatprep.subr.bf16.mxu0 0
    %466 = vmatpush1.bf16.msra.mxu0 0
    %467 = vmatprep.subr.bf16.mxu0 0
    %468 = vmatpush1.bf16.msra.mxu0 0
    %469 = vmatprep.subr.bf16.mxu0 0
    %470 = vmatpush1.bf16.msra.mxu0 0
    %471 = vmatprep.subr.bf16.mxu0 0
    %472 = vmatpush1.bf16.msra.mxu0 0
    %473 = vmatprep.subr.bf16.mxu0 0
    %474 = vmatpush1.bf16.msra.mxu0 0
    %475 = vmatprep.subr.bf16.mxu0 0
    %476 = vmatpush1.bf16.msra.mxu0 0
    %477 = vmatprep.subr.bf16.mxu0 0
    %478 = vmatpush1.bf16.msra.mxu0 0
    %479 = vmatprep.subr.bf16.mxu0 0
    %480 = vmatpush1.bf16.msra.mxu0 0
    %481 = vmatprep.subr.bf16.mxu0 0
    %482 = vmatpush1.bf16.msra.mxu0 0
    %483 = vmatprep.subr.bf16.mxu0 0
    %484 = vmatpush1.bf16.msra.mxu0 0
    %485 = vmatprep.subr.bf16.mxu0 0
    %486 = vmatpush1.bf16.msra.mxu0 0
    %487 = vmatprep.mubr.bf16.mxu0 0
    %488 = vmatmul.mubr.bf16.gmra.mrb[0].mxu0 %v453
    %v489 = vpop.f32.mrb[0].mxu0
    %v490 = vadd.f32 0.0, %v489
    %v491 = vpop.f32.mrb[0].mxu0
    %v492 = vpop.f32.mrb[0].mxu0
    %v493 = vadd.f32 0.0, %v492
    %v494 = vpop.f32.mrb[0].mxu0
    %495 = vdwg.mxu0
    %v496 = vpack.c.bf16 %v493, %v490
    %s497 = scalar_lea.vmem [#allocation5], 64
    %v498 = vld [vmem:[%s497] sm:$0xf]
    %v499 = vld [vmem:[%s497 + $0x4] sm:$0xf]
    %v500 = vld [vmem:[%s497 + $0x8] sm:$0xf]
    %v501 = vld [vmem:[%s497 + $0xc] sm:$0xf]
    %v502 = vld [vmem:[%s497 + $0x10] sm:$0xf]
    %v503 = vld [vmem:[%s497 + $0x14] sm:$0xf]
    %v504 = vld [vmem:[%s497 + $0x18] sm:$0xf]
    %v505 = vld [vmem:[%s497 + $0x1c] sm:$0xf]
    %v514 = vunpack.c.l.b16 %v498
    %v515 = vunpack.c.l.b16 %v499
    %v516 = vunpack.c.l.b16 %v500
    %v517 = vunpack.c.l.b16 %v501
    %v518 = vunpack.c.l.b16 %v502
    %v519 = vunpack.c.l.b16 %v503
    %v520 = vunpack.c.l.b16 %v504
    %v521 = vunpack.c.l.b16 %v505
    %v522 = vpack.c.b16 %v515, %v514
    %v523 = vpack.c.b16 %v517, %v516
    %v524 = vpack.c.b16 %v519, %v518
    %v525 = vpack.c.b16 %v521, %v520
    %v531 = vsel %vm331, %v496, 0
    %533 = vmatprep.subr.bf16.mxu0 0
    %534 = vmatpush1.bf16.msra.mxu0 %v522
    %535 = vmatprep.subr.bf16.mxu0 0
    %536 = vmatpush1.bf16.msra.mxu0 %v523
    %537 = vmatprep.subr.bf16.mxu0 0
    %538 = vmatpush1.bf16.msra.mxu0 %v524
    %539 = vmatprep.subr.bf16.mxu0 0
    %540 = vmatpush1.bf16.msra.mxu0 %v525
    %541 = vmatprep.subr.bf16.mxu0 0
    %542 = vmatpush1.bf16.msra.mxu0 0
    %543 = vmatprep.subr.bf16.mxu0 0
    %544 = vmatpush1.bf16.msra.mxu0 0
    %545 = vmatprep.subr.bf16.mxu0 0
    %546 = vmatpush1.bf16.msra.mxu0 0
    %547 = vmatprep.subr.bf16.mxu0 0
    %548 = vmatpush1.bf16.msra.mxu0 0
    %549 = vmatprep.subr.bf16.mxu0 0
    %550 = vmatpush1.bf16.msra.mxu0 0
    %551 = vmatprep.subr.bf16.mxu0 0
    %552 = vmatpush1.bf16.msra.mxu0 0
    %553 = vmatprep.subr.bf16.mxu0 0
    %554 = vmatpush1.bf16.msra.mxu0 0
    %555 = vmatprep.subr.bf16.mxu0 0
    %556 = vmatpush1.bf16.msra.mxu0 0
    %557 = vmatprep.subr.bf16.mxu0 0
    %558 = vmatpush1.bf16.msra.mxu0 0
    %559 = vmatprep.subr.bf16.mxu0 0
    %560 = vmatpush1.bf16.msra.mxu0 0
    %561 = vmatprep.subr.bf16.mxu0 0
    %562 = vmatpush1.bf16.msra.mxu0 0
    %563 = vmatprep.subr.bf16.mxu0 0
    %564 = vmatpush1.bf16.msra.mxu0 0
    %565 = vmatprep.mubr.bf16.mxu0 0
    %566 = vmatmul.mubr.bf16.gmra.mrb[0].mxu0 %v531
    %v567 = vpop.f32.mrb[0].mxu0
    %v568 = vadd.f32 0.0, %v567
    %v569 = vpop.f32.mrb[0].mxu0
    %v570 = vpop.f32.mrb[0].mxu0
    %v571 = vadd.f32 0.0, %v570
    %v572 = vpop.f32.mrb[0].mxu0
    %573 = vdwg.mxu0
    %v574 = vadd.f32 %v438, %v568
    %v575 = vadd.f32 %v441, %v571
    %v576 = vld [vmem:[%s3] sm:$0x1]
    %v577 = vlaneseq
    %v578 = vshrl.u32 %v577, 7
    %v579 = vsub.s32 0, %v578
    %v580 = vrot.slane %v576, %v579
    %v581 = vadd.f32 %v574, %v580
    %v582 = vadd.f32 %v575, %v580
    %vm583 = vcmp.gt.f32.partialorder %v581, 0.0
    %vm584 = vcmp.gt.f32.partialorder %v582, 0.0
    %v585 = vmul.f32 %v581, 0.2
    %v586 = vmul.f32 %v582, 0.2
    %v587 = vsel %vm583, %v581, %v585
    %v588 = vsel %vm584, %v582, %v586
    %v589 = vld [vmem:[%s3 + $0x1] sm:$0x1]
    %v590 = vlaneseq
    %v591 = vshrl.u32 %v590, 7
    %v592 = vsub.s32 0, %v591
    %v593 = vrot.slane %v589, %v592
    %v594 = vmul.f32 %v587, %v593
    %v595 = vmul.f32 %v588, %v593
    %v596 = vld [vmem:[%s3 + $0x2] sm:$0x1]
    %v597 = vlaneseq
    %v598 = vshrl.u32 %v597, 7
    %v599 = vsub.s32 0, %v598
    %v600 = vrot.slane %v596, %v599
    %v601 = vadd.f32 %v594, %v600
    %v602 = vadd.f32 %v595, %v600
    %v603 = vpack.c.bf16 %v602, %v601
    %v604 = vld [vmem:[#allocation7] sm:$0xf]
    %vm605 = vcmask 130048
    %v607 = vsel %vm605, %v604, 0
    %609 = vmatprep.subr.bf16.mxu0 0
    %610 = vmatpush1.bf16.msra.mxu0 %v603
    %611 = vmatprep.subr.bf16.mxu0 0
    %612 = vmatpush1.bf16.msra.mxu0 0
    %613 = vmatprep.subr.bf16.mxu0 0
    %614 = vmatpush1.bf16.msra.mxu0 0
    %615 = vmatprep.subr.bf16.mxu0 0
    %616 = vmatpush1.bf16.msra.mxu0 0
    %617 = vmatprep.subr.bf16.mxu0 0
    %618 = vmatpush1.bf16.msra.mxu0 0
    %619 = vmatprep.subr.bf16.mxu0 0
    %620 = vmatpush1.bf16.msra.mxu0 0
    %621 = vmatprep.subr.bf16.mxu0 0
    %622 = vmatpush1.bf16.msra.mxu0 0
    %623 = vmatprep.subr.bf16.mxu0 0
    %624 = vmatpush1.bf16.msra.mxu0 0
    %625 = vmatprep.subr.bf16.mxu0 0
    %626 = vmatpush1.bf16.msra.mxu0 0
    %627 = vmatprep.subr.bf16.mxu0 0
    %628 = vmatpush1.bf16.msra.mxu0 0
    %629 = vmatprep.subr.bf16.mxu0 0
    %630 = vmatpush1.bf16.msra.mxu0 0
    %631 = vmatprep.subr.bf16.mxu0 0
    %632 = vmatpush1.bf16.msra.mxu0 0
    %633 = vmatprep.subr.bf16.mxu0 0
    %634 = vmatpush1.bf16.msra.mxu0 0
    %635 = vmatprep.subr.bf16.mxu0 0
    %636 = vmatpush1.bf16.msra.mxu0 0
    %637 = vmatprep.subr.bf16.mxu0 0
    %638 = vmatpush1.bf16.msra.mxu0 0
    %639 = vmatprep.subr.bf16.mxu0 0
    %640 = vmatpush1.bf16.msra.mxu0 0
    %641 = vmatprep.mubr.bf16.mxu0 0
    %642 = vmatmul.mubr.bf16.gmra.mrb[0].mxu0 %v607
    %v643 = vpop.f32.mrb[0].mxu0
    %v644 = vadd.f32 0.0, %v643
    %v645 = vpop.f32.mrb[0].mxu0
    %v646 = vpop.f32.mrb[0].mxu0
    %v647 = vpop.f32.mrb[0].mxu0
    %648 = vdwg.mxu0
    %v649 = vpack.c.bf16 %v644, %v644
    %v650 = vld [vmem:[%s5] sm:$0xf]
    %v651 = vld [vmem:[%s5 + $0x4] sm:$0xf]
    %v652 = vld [vmem:[%s5 + $0x8] sm:$0xf]
    %v653 = vld [vmem:[%s5 + $0xc] sm:$0xf]
    %v654 = vld [vmem:[%s5 + $0x10] sm:$0xf]
    %v655 = vld [vmem:[%s5 + $0x14] sm:$0xf]
    %v656 = vld [vmem:[%s5 + $0x18] sm:$0xf]
    %v657 = vld [vmem:[%s5 + $0x1c] sm:$0xf]
    %v658 = vld [vmem:[%s5 + $0x20] sm:$0xf]
    %v659 = vld [vmem:[%s5 + $0x24] sm:$0xf]
    %v660 = vld [vmem:[%s5 + $0x28] sm:$0xf]
    %v661 = vld [vmem:[%s5 + $0x2c] sm:$0xf]
    %v662 = vld [vmem:[%s5 + $0x30] sm:$0xf]
    %v663 = vld [vmem:[%s5 + $0x34] sm:$0xf]
    %v664 = vld [vmem:[%s5 + $0x38] sm:$0xf]
    %v665 = vld [vmem:[%s5 + $0x3c] sm:$0xf]
    %s666 = scalar_lea.vmem [#allocation7], 4
    %v667 = vld [vmem:[%s666] sm:$0xf]
    %v669 = vsel %vm605, %v667, 0
    %671 = vmatprep.subr.bf16.mxu0 0
    %672 = vmatpush1.bf16.msra.mxu0 %v603
    %673 = vmatprep.subr.bf16.mxu0 0
    %674 = vmatpush1.bf16.msra.mxu0 0
    %675 = vmatprep.subr.bf16.mxu0 0
    %676 = vmatpush1.bf16.msra.mxu0 0
    %677 = vmatprep.subr.bf16.mxu0 0
    %678 = vmatpush1.bf16.msra.mxu0 0
    %679 = vmatprep.subr.bf16.mxu0 0
    %680 = vmatpush1.bf16.msra.mxu0 0
    %681 = vmatprep.subr.bf16.mxu0 0
    %682 = vmatpush1.bf16.msra.mxu0 0
    %683 = vmatprep.subr.bf16.mxu0 0
    %684 = vmatpush1.bf16.msra.mxu0 0
    %685 = vmatprep.subr.bf16.mxu0 0
    %686 = vmatpush1.bf16.msra.mxu0 0
    %687 = vmatprep.subr.bf16.mxu0 0
    %688 = vmatpush1.bf16.msra.mxu0 0
    %689 = vmatprep.subr.bf16.mxu0 0
    %690 = vmatpush1.bf16.msra.mxu0 0
    %691 = vmatprep.subr.bf16.mxu0 0
    %692 = vmatpush1.bf16.msra.mxu0 0
    %693 = vmatprep.subr.bf16.mxu0 0
    %694 = vmatpush1.bf16.msra.mxu0 0
    %695 = vmatprep.subr.bf16.mxu0 0
    %696 = vmatpush1.bf16.msra.mxu0 0
    %697 = vmatprep.subr.bf16.mxu0 0
    %698 = vmatpush1.bf16.msra.mxu0 0
    %699 = vmatprep.subr.bf16.mxu0 0
    %700 = vmatpush1.bf16.msra.mxu0 0
    %701 = vmatprep.subr.bf16.mxu0 0
    %702 = vmatpush1.bf16.msra.mxu0 0
    %703 = vmatprep.mubr.bf16.mxu0 0
    %704 = vmatmul.mubr.bf16.gmra.mrb[0].mxu0 %v669
    %v705 = vpop.f32.mrb[0].mxu0
    %v706 = vadd.f32 0.0, %v705
    %v707 = vpop.f32.mrb[0].mxu0
    %v708 = vpop.f32.mrb[0].mxu0
    %v709 = vpop.f32.mrb[0].mxu0
    %710 = vdwg.mxu0
    %v711 = vpack.c.bf16 %v706, %v706
    %s712 = scalar_lea.vmem %s5, 64
    %v713 = vld [vmem:[%s712] sm:$0xf]
    %v714 = vld [vmem:[%s712 + $0x4] sm:$0xf]
    %v715 = vld [vmem:[%s712 + $0x8] sm:$0xf]
    %v716 = vld [vmem:[%s712 + $0xc] sm:$0xf]
    %v717 = vld [vmem:[%s712 + $0x10] sm:$0xf]
    %v718 = vld [vmem:[%s712 + $0x14] sm:$0xf]
    %v719 = vld [vmem:[%s712 + $0x18] sm:$0xf]
    %v720 = vld [vmem:[%s712 + $0x1c] sm:$0xf]
    %v721 = vld [vmem:[%s712 + $0x20] sm:$0xf]
    %v722 = vld [vmem:[%s712 + $0x24] sm:$0xf]
    %v723 = vld [vmem:[%s712 + $0x28] sm:$0xf]
    %v724 = vld [vmem:[%s712 + $0x2c] sm:$0xf]
    %v725 = vld [vmem:[%s712 + $0x30] sm:$0xf]
    %v726 = vld [vmem:[%s712 + $0x34] sm:$0xf]
    %v727 = vld [vmem:[%s712 + $0x38] sm:$0xf]
    %v728 = vld [vmem:[%s712 + $0x3c] sm:$0xf]
    %v745 = vunpack.c.l.b16 %v713
    %v746 = vunpack.c.l.b16 %v714
    %v747 = vunpack.c.l.b16 %v715
    %v748 = vunpack.c.l.b16 %v716
    %v749 = vunpack.c.l.b16 %v717
    %v750 = vunpack.c.l.b16 %v718
    %v751 = vunpack.c.l.b16 %v719
    %v752 = vunpack.c.l.b16 %v720
    %v753 = vunpack.c.l.b16 %v721
    %v754 = vunpack.c.l.b16 %v722
    %v755 = vunpack.c.l.b16 %v723
    %v756 = vunpack.c.l.b16 %v724
    %v757 = vunpack.c.l.b16 %v725
    %v758 = vunpack.c.l.b16 %v726
    %v759 = vunpack.c.l.b16 %v727
    %v760 = vunpack.c.l.b16 %v728
    %v761 = vpack.c.b16 %v746, %v745
    %v762 = vpack.c.b16 %v748, %v747
    %v763 = vpack.c.b16 %v750, %v749
    %v764 = vpack.c.b16 %v752, %v751
    %v765 = vpack.c.b16 %v754, %v753
    %v766 = vpack.c.b16 %v756, %v755
    %v767 = vpack.c.b16 %v758, %v757
    %v768 = vpack.c.b16 %v760, %v759
    %777 = vmatprep.subr.bf16.mxu0 0
    %778 = vmatpush1.bf16.msra.mxu0 %v761
    %779 = vmatprep.subr.bf16.mxu0 0
    %780 = vmatpush1.bf16.msra.mxu0 %v762
    %781 = vmatprep.subr.bf16.mxu0 0
    %782 = vmatpush1.bf16.msra.mxu0 %v763
    %783 = vmatprep.subr.bf16.mxu0 0
    %784 = vmatpush1.bf16.msra.mxu0 %v764
    %785 = vmatprep.subr.bf16.mxu0 0
    %786 = vmatpush1.bf16.msra.mxu0 %v765
    %787 = vmatprep.subr.bf16.mxu0 0
    %788 = vmatpush1.bf16.msra.mxu0 %v766
    %789 = vmatprep.subr.bf16.mxu0 0
    %790 = vmatpush1.bf16.msra.mxu0 %v767
    %791 = vmatprep.subr.bf16.mxu0 0
    %792 = vmatpush1.bf16.msra.mxu0 %v768
    %793 = vmatprep.subr.bf16.mxu0 0
    %794 = vmatpush1.bf16.msra.mxu0 0
    %795 = vmatprep.subr.bf16.mxu0 0
    %796 = vmatpush1.bf16.msra.mxu0 0
    %797 = vmatprep.subr.bf16.mxu0 0
    %798 = vmatpush1.bf16.msra.mxu0 0
    %799 = vmatprep.subr.bf16.mxu0 0
    %800 = vmatpush1.bf16.msra.mxu0 0
    %801 = vmatprep.subr.bf16.mxu0 0
    %802 = vmatpush1.bf16.msra.mxu0 0
    %803 = vmatprep.subr.bf16.mxu0 0
    %804 = vmatpush1.bf16.msra.mxu0 0
    %805 = vmatprep.subr.bf16.mxu0 0
    %806 = vmatpush1.bf16.msra.mxu0 0
    %807 = vmatprep.subr.bf16.mxu0 0
    %808 = vmatpush1.bf16.msra.mxu0 0
    %809 = vmatprep.mubr.bf16.mxu0 0
    %810 = vmatmul.mubr.bf16.gmra.mrb[0].mxu0 %v711
    %v811 = vpop.f32.mrb[0].mxu0
    %v812 = vadd.f32 0.0, %v811
    %v813 = vpop.f32.mrb[0].mxu0
    %v814 = vpop.f32.mrb[0].mxu0
    %v815 = vpop.f32.mrb[0].mxu0
    %816 = vdwg.mxu0
    %v833 = vunpack.c.l.b16 %v650
    %v834 = vunpack.c.l.b16 %v651
    %v835 = vunpack.c.l.b16 %v652
    %v836 = vunpack.c.l.b16 %v653
    %v837 = vunpack.c.l.b16 %v654
    %v838 = vunpack.c.l.b16 %v655
    %v839 = vunpack.c.l.b16 %v656
    %v840 = vunpack.c.l.b16 %v657
    %v841 = vunpack.c.l.b16 %v658
    %v842 = vunpack.c.l.b16 %v659
    %v843 = vunpack.c.l.b16 %v660
    %v844 = vunpack.c.l.b16 %v661
    %v845 = vunpack.c.l.b16 %v662
    %v846 = vunpack.c.l.b16 %v663
    %v847 = vunpack.c.l.b16 %v664
    %v848 = vunpack.c.l.b16 %v665
    %v849 = vpack.c.b16 %v834, %v833
    %v850 = vpack.c.b16 %v836, %v835
    %v851 = vpack.c.b16 %v838, %v837
    %v852 = vpack.c.b16 %v840, %v839
    %v853 = vpack.c.b16 %v842, %v841
    %v854 = vpack.c.b16 %v844, %v843
    %v855 = vpack.c.b16 %v846, %v845
    %v856 = vpack.c.b16 %v848, %v847
    %865 = vmatprep.subr.bf16.mxu0 0
    %866 = vmatpush1.bf16.msra.mxu0 %v849
    %867 = vmatprep.subr.bf16.mxu0 0
    %868 = vmatpush1.bf16.msra.mxu0 %v850
    %869 = vmatprep.subr.bf16.mxu0 0
    %870 = vmatpush1.bf16.msra.mxu0 %v851
    %871 = vmatprep.subr.bf16.mxu0 0
    %872 = vmatpush1.bf16.msra.mxu0 %v852
    %873 = vmatprep.subr.bf16.mxu0 0
    %874 = vmatpush1.bf16.msra.mxu0 %v853
    %875 = vmatprep.subr.bf16.mxu0 0
    %876 = vmatpush1.bf16.msra.mxu0 %v854
    %877 = vmatprep.subr.bf16.mxu0 0
    %878 = vmatpush1.bf16.msra.mxu0 %v855
    %879 = vmatprep.subr.bf16.mxu0 0
    %880 = vmatpush1.bf16.msra.mxu0 %v856
    %881 = vmatprep.subr.bf16.mxu0 0
    %882 = vmatpush1.bf16.msra.mxu0 0
    %883 = vmatprep.subr.bf16.mxu0 0
    %884 = vmatpush1.bf16.msra.mxu0 0
    %885 = vmatprep.subr.bf16.mxu0 0
    %886 = vmatpush1.bf16.msra.mxu0 0
    %887 = vmatprep.subr.bf16.mxu0 0
    %888 = vmatpush1.bf16.msra.mxu0 0
    %889 = vmatprep.subr.bf16.mxu0 0
    %890 = vmatpush1.bf16.msra.mxu0 0
    %891 = vmatprep.subr.bf16.mxu0 0
    %892 = vmatpush1.bf16.msra.mxu0 0
    %893 = vmatprep.subr.bf16.mxu0 0
    %894 = vmatpush1.bf16.msra.mxu0 0
    %895 = vmatprep.subr.bf16.mxu0 0
    %896 = vmatpush1.bf16.msra.mxu0 0
    %897 = vmatprep.mubr.bf16.mxu0 0
    %898 = vmatmul.mubr.bf16.gmra.mrb[0].mxu0 %v649
    %v899 = vpop.f32.mrb[0].mxu0
    %v900 = vadd.f32 %v812, %v899
    %v901 = vpop.f32.mrb[0].mxu0
    %v902 = vpop.f32.mrb[0].mxu0
    %v903 = vpop.f32.mrb[0].mxu0
    %904 = vdwg.mxu0
    %s905 = scalar_lea.vmem [#allocation7], 8
    %v906 = vld [vmem:[%s905] sm:$0xf]
    %v908 = vsel %vm605, %v906, 0
    %910 = vmatprep.subr.bf16.mxu0 0
    %911 = vmatpush1.bf16.msra.mxu0 %v603
    %912 = vmatprep.subr.bf16.mxu0 0
    %913 = vmatpush1.bf16.msra.mxu0 0
    %914 = vmatprep.subr.bf16.mxu0 0
    %915 = vmatpush1.bf16.msra.mxu0 0
    %916 = vmatprep.subr.bf16.mxu0 0
    %917 = vmatpush1.bf16.msra.mxu0 0
    %918 = vmatprep.subr.bf16.mxu0 0
    %919 = vmatpush1.bf16.msra.mxu0 0
    %920 = vmatprep.subr.bf16.mxu0 0
    %921 = vmatpush1.bf16.msra.mxu0 0
    %922 = vmatprep.subr.bf16.mxu0 0
    %923 = vmatpush1.bf16.msra.mxu0 0
    %924 = vmatprep.subr.bf16.mxu0 0
    %925 = vmatpush1.bf16.msra.mxu0 0
    %926 = vmatprep.subr.bf16.mxu0 0
    %927 = vmatpush1.bf16.msra.mxu0 0
    %928 = vmatprep.subr.bf16.mxu0 0
    %929 = vmatpush1.bf16.msra.mxu0 0
    %930 = vmatprep.subr.bf16.mxu0 0
    %931 = vmatpush1.bf16.msra.mxu0 0
    %932 = vmatprep.subr.bf16.mxu0 0
    %933 = vmatpush1.bf16.msra.mxu0 0
    %934 = vmatprep.subr.bf16.mxu0 0
    %935 = vmatpush1.bf16.msra.mxu0 0
    %936 = vmatprep.subr.bf16.mxu0 0
    %937 = vmatpush1.bf16.msra.mxu0 0
    %938 = vmatprep.subr.bf16.mxu0 0
    %939 = vmatpush1.bf16.msra.mxu0 0
    %940 = vmatprep.subr.bf16.mxu0 0
    %941 = vmatpush1.bf16.msra.mxu0 0
    %942 = vmatprep.mubr.bf16.mxu0 0
    %943 = vmatmul.mubr.bf16.gmra.mrb[0].mxu0 %v908
    %v944 = vpop.f32.mrb[0].mxu0
    %v945 = vadd.f32 0.0, %v944
    %v946 = vpop.f32.mrb[0].mxu0
    %v947 = vpop.f32.mrb[0].mxu0
    %v948 = vpop.f32.mrb[0].mxu0
    %949 = vdwg.mxu0
    %v950 = vpack.c.bf16 %v945, %v945
    %s951 = scalar_lea.vmem %s5, 128
    %v952 = vld [vmem:[%s951] sm:$0xf]
    %v953 = vld [vmem:[%s951 + $0x4] sm:$0xf]
    %v954 = vld [vmem:[%s951 + $0x8] sm:$0xf]
    %v955 = vld [vmem:[%s951 + $0xc] sm:$0xf]
    %v956 = vld [vmem:[%s951 + $0x10] sm:$0xf]
    %v957 = vld [vmem:[%s951 + $0x14] sm:$0xf]
    %v958 = vld [vmem:[%s951 + $0x18] sm:$0xf]
    %v959 = vld [vmem:[%s951 + $0x1c] sm:$0xf]
    %v960 = vld [vmem:[%s951 + $0x20] sm:$0xf]
    %v961 = vld [vmem:[%s951 + $0x24] sm:$0xf]
    %v962 = vld [vmem:[%s951 + $0x28] sm:$0xf]
    %v963 = vld [vmem:[%s951 + $0x2c] sm:$0xf]
    %v964 = vld [vmem:[%s951 + $0x30] sm:$0xf]
    %v965 = vld [vmem:[%s951 + $0x34] sm:$0xf]
    %v966 = vld [vmem:[%s951 + $0x38] sm:$0xf]
    %v967 = vld [vmem:[%s951 + $0x3c] sm:$0xf]
    %v984 = vunpack.c.l.b16 %v952
    %v985 = vunpack.c.l.b16 %v953
    %v986 = vunpack.c.l.b16 %v954
    %v987 = vunpack.c.l.b16 %v955
    %v988 = vunpack.c.l.b16 %v956
    %v989 = vunpack.c.l.b16 %v957
    %v990 = vunpack.c.l.b16 %v958
    %v991 = vunpack.c.l.b16 %v959
    %v992 = vunpack.c.l.b16 %v960
    %v993 = vunpack.c.l.b16 %v961
    %v994 = vunpack.c.l.b16 %v962
    %v995 = vunpack.c.l.b16 %v963
    %v996 = vunpack.c.l.b16 %v964
    %v997 = vunpack.c.l.b16 %v965
    %v998 = vunpack.c.l.b16 %v966
    %v999 = vunpack.c.l.b16 %v967
    %v1000 = vpack.c.b16 %v985, %v984
    %v1001 = vpack.c.b16 %v987, %v986
    %v1002 = vpack.c.b16 %v989, %v988
    %v1003 = vpack.c.b16 %v991, %v990
    %v1004 = vpack.c.b16 %v993, %v992
    %v1005 = vpack.c.b16 %v995, %v994
    %v1006 = vpack.c.b16 %v997, %v996
    %v1007 = vpack.c.b16 %v999, %v998
    %1016 = vmatprep.subr.bf16.mxu0 0
    %1017 = vmatpush1.bf16.msra.mxu0 %v1000
    %1018 = vmatprep.subr.bf16.mxu0 0
    %1019 = vmatpush1.bf16.msra.mxu0 %v1001
    %1020 = vmatprep.subr.bf16.mxu0 0
    %1021 = vmatpush1.bf16.msra.mxu0 %v1002
    %1022 = vmatprep.subr.bf16.mxu0 0
    %1023 = vmatpush1.bf16.msra.mxu0 %v1003
    %1024 = vmatprep.subr.bf16.mxu0 0
    %1025 = vmatpush1.bf16.msra.mxu0 %v1004
    %1026 = vmatprep.subr.bf16.mxu0 0
    %1027 = vmatpush1.bf16.msra.mxu0 %v1005
    %1028 = vmatprep.subr.bf16.mxu0 0
    %1029 = vmatpush1.bf16.msra.mxu0 %v1006
    %1030 = vmatprep.subr.bf16.mxu0 0
    %1031 = vmatpush1.bf16.msra.mxu0 %v1007
    %1032 = vmatprep.subr.bf16.mxu0 0
    %1033 = vmatpush1.bf16.msra.mxu0 0
    %1034 = vmatprep.subr.bf16.mxu0 0
    %1035 = vmatpush1.bf16.msra.mxu0 0
    %1036 = vmatprep.subr.bf16.mxu0 0
    %1037 = vmatpush1.bf16.msra.mxu0 0
    %1038 = vmatprep.subr.bf16.mxu0 0
    %1039 = vmatpush1.bf16.msra.mxu0 0
    %1040 = vmatprep.subr.bf16.mxu0 0
    %1041 = vmatpush1.bf16.msra.mxu0 0
    %1042 = vmatprep.subr.bf16.mxu0 0
    %1043 = vmatpush1.bf16.msra.mxu0 0
    %1044 = vmatprep.subr.bf16.mxu0 0
    %1045 = vmatpush1.bf16.msra.mxu0 0
    %1046 = vmatprep.subr.bf16.mxu0 0
    %1047 = vmatpush1.bf16.msra.mxu0 0
    %1048 = vmatprep.mubr.bf16.mxu0 0
    %1049 = vmatmul.mubr.bf16.gmra.mrb[0].mxu0 %v950
    %v1050 = vpop.f32.mrb[0].mxu0
    %v1051 = vadd.f32 0.0, %v1050
    %v1052 = vpop.f32.mrb[0].mxu0
    %v1053 = vpop.f32.mrb[0].mxu0
    %v1054 = vpop.f32.mrb[0].mxu0
    %1055 = vdwg.mxu0
    %v1056 = vadd.f32 %v900, %v1051
    %v1057 = vld [vmem:[#allocation8] sm:$0x1]
    %v1058 = vlaneseq
    %v1059 = vshrl.u32 %v1058, 7
    %v1060 = vsub.s32 0, %v1059
    %v1061 = vrot.slane %v1057, %v1060
    %v1062 = vadd.f32 %v1056, %v1061
    %vm1063 = vcmp.gt.f32.partialorder %v1062, 0.0
    %v1064 = vmul.f32 %v1062, 0.2
    %v1065 = vsel %vm1063, %v1062, %v1064
    %v1066 = vld [vmem:[#allocation8 + $0x1] sm:$0x1]
    %v1067 = vlaneseq
    %v1068 = vshrl.u32 %v1067, 7
    %v1069 = vsub.s32 0, %v1068
    %v1070 = vrot.slane %v1066, %v1069
    %v1071 = vmul.f32 %v1065, %v1070
    %v1072 = vld [vmem:[#allocation8 + $0x2] sm:$0x1]
    %v1073 = vlaneseq
    %v1074 = vshrl.u32 %v1073, 7
    %v1075 = vsub.s32 0, %v1074
    %v1076 = vrot.slane %v1072, %v1075
    %v1077 = vadd.f32 %v1071, %v1076
    %v1078 = vpack.c.bf16 %v1077, %v1077
    %v1079 = vld [vmem:[#allocation10] sm:$0x3]
    %vm1080 = vcmask 64512
    %v1082 = vsel %vm1080, %v1079, 0
    %vm1084 = vcmask 1043456
    %v1086 = vsel %vm1084, %v1078, 0
    %1088 = vmatprep.subr.bf16.mxu0 0
    %1089 = vmatpush1.bf16.msra.mxu0 %v1086
    %1090 = vmatprep.subr.bf16.mxu0 0
    %1091 = vmatpush1.bf16.msra.mxu0 0
    %1092 = vmatprep.subr.bf16.mxu0 0
    %1093 = vmatpush1.bf16.msra.mxu0 0
    %1094 = vmatprep.subr.bf16.mxu0 0
    %1095 = vmatpush1.bf16.msra.mxu0 0
    %1096 = vmatprep.subr.bf16.mxu0 0
    %1097 = vmatpush1.bf16.msra.mxu0 0
    %1098 = vmatprep.subr.bf16.mxu0 0
    %1099 = vmatpush1.bf16.msra.mxu0 0
    %1100 = vmatprep.subr.bf16.mxu0 0
    %1101 = vmatpush1.bf16.msra.mxu0 0
    %1102 = vmatprep.subr.bf16.mxu0 0
    %1103 = vmatpush1.bf16.msra.mxu0 0
    %1104 = vmatprep.subr.bf16.mxu0 0
    %1105 = vmatpush1.bf16.msra.mxu0 0
    %1106 = vmatprep.subr.bf16.mxu0 0
    %1107 = vmatpush1.bf16.msra.mxu0 0
    %1108 = vmatprep.subr.bf16.mxu0 0
    %1109 = vmatpush1.bf16.msra.mxu0 0
    %1110 = vmatprep.subr.bf16.mxu0 0
    %1111 = vmatpush1.bf16.msra.mxu0 0
    %1112 = vmatprep.subr.bf16.mxu0 0
    %1113 = vmatpush1.bf16.msra.mxu0 0
    %1114 = vmatprep.subr.bf16.mxu0 0
    %1115 = vmatpush1.bf16.msra.mxu0 0
    %1116 = vmatprep.subr.bf16.mxu0 0
    %1117 = vmatpush1.bf16.msra.mxu0 0
    %1118 = vmatprep.subr.bf16.mxu0 0
    %1119 = vmatpush1.bf16.msra.mxu0 0
    %1120 = vmatprep.mubr.bf16.mxu0 0
    %1121 = vmatmul.mubr.bf16.gmra.mrb[0].mxu0 %v1082
    %v1122 = vpop.f32.mrb[0].mxu0
    %v1123 = vadd.f32 0.0, %v1122
    %v1124 = vpop.f32.mrb[0].mxu0
    %v1125 = vpop.f32.mrb[0].mxu0
    %v1126 = vpop.f32.mrb[0].mxu0
    %1127 = vdwg.mxu0
    %v1128 = vpack.c.bf16 %v1123, %v1123
    %v1129 = vld [vmem:[%s8] sm:$0xf]
    %v1130 = vld [vmem:[%s8 + $0x4] sm:$0xf]
    %v1131 = vld [vmem:[%s8 + $0x8] sm:$0xf]
    %v1132 = vld [vmem:[%s8 + $0xc] sm:$0xf]
    %v1133 = vld [vmem:[%s8 + $0x10] sm:$0xf]
    %v1134 = vld [vmem:[%s8 + $0x14] sm:$0xf]
    %v1135 = vld [vmem:[%s8 + $0x18] sm:$0xf]
    %v1136 = vld [vmem:[%s8 + $0x1c] sm:$0xf]
    %v1137 = vld [vmem:[%s8 + $0x20] sm:$0xf]
    %v1138 = vld [vmem:[%s8 + $0x24] sm:$0xf]
    %v1139 = vld [vmem:[%s8 + $0x28] sm:$0xf]
    %v1140 = vld [vmem:[%s8 + $0x2c] sm:$0xf]
    %v1141 = vld [vmem:[%s8 + $0x30] sm:$0xf]
    %v1142 = vld [vmem:[%s8 + $0x34] sm:$0xf]
    %v1143 = vld [vmem:[%s8 + $0x38] sm:$0xf]
    %v1144 = vld [vmem:[%s8 + $0x3c] sm:$0xf]
    %s1145 = scalar_lea.vmem [#allocation10], 2
    %v1146 = vld [vmem:[%s1145] sm:$0x3]
    %v1148 = vsel %vm1080, %v1146, 0
    %1150 = vmatprep.subr.bf16.mxu0 0
    %1151 = vmatpush1.bf16.msra.mxu0 %v1086
    %1152 = vmatprep.subr.bf16.mxu0 0
    %1153 = vmatpush1.bf16.msra.mxu0 0
    %1154 = vmatprep.subr.bf16.mxu0 0
    %1155 = vmatpush1.bf16.msra.mxu0 0
    %1156 = vmatprep.subr.bf16.mxu0 0
    %1157 = vmatpush1.bf16.msra.mxu0 0
    %1158 = vmatprep.subr.bf16.mxu0 0
    %1159 = vmatpush1.bf16.msra.mxu0 0
    %1160 = vmatprep.subr.bf16.mxu0 0
    %1161 = vmatpush1.bf16.msra.mxu0 0
    %1162 = vmatprep.subr.bf16.mxu0 0
    %1163 = vmatpush1.bf16.msra.mxu0 0
    %1164 = vmatprep.subr.bf16.mxu0 0
    %1165 = vmatpush1.bf16.msra.mxu0 0
    %1166 = vmatprep.subr.bf16.mxu0 0
    %1167 = vmatpush1.bf16.msra.mxu0 0
    %1168 = vmatprep.subr.bf16.mxu0 0
    %1169 = vmatpush1.bf16.msra.mxu0 0
    %1170 = vmatprep.subr.bf16.mxu0 0
    %1171 = vmatpush1.bf16.msra.mxu0 0
    %1172 = vmatprep.subr.bf16.mxu0 0
    %1173 = vmatpush1.bf16.msra.mxu0 0
    %1174 = vmatprep.subr.bf16.mxu0 0
    %1175 = vmatpush1.bf16.msra.mxu0 0
    %1176 = vmatprep.subr.bf16.mxu0 0
    %1177 = vmatpush1.bf16.msra.mxu0 0
    %1178 = vmatprep.subr.bf16.mxu0 0
    %1179 = vmatpush1.bf16.msra.mxu0 0
    %1180 = vmatprep.subr.bf16.mxu0 0
    %1181 = vmatpush1.bf16.msra.mxu0 0
    %1182 = vmatprep.mubr.bf16.mxu0 0
    %1183 = vmatmul.mubr.bf16.gmra.mrb[0].mxu0 %v1148
    %v1184 = vpop.f32.mrb[0].mxu0
    %v1185 = vadd.f32 0.0, %v1184
    %v1186 = vpop.f32.mrb[0].mxu0
    %v1187 = vpop.f32.mrb[0].mxu0
    %v1188 = vpop.f32.mrb[0].mxu0
    %1189 = vdwg.mxu0
    %v1190 = vpack.c.bf16 %v1185, %v1185
    %s1191 = scalar_lea.vmem %s8, 64
    %v1192 = vld [vmem:[%s1191] sm:$0xf]
    %v1193 = vld [vmem:[%s1191 + $0x4] sm:$0xf]
    %v1194 = vld [vmem:[%s1191 + $0x8] sm:$0xf]
    %v1195 = vld [vmem:[%s1191 + $0xc] sm:$0xf]
    %v1196 = vld [vmem:[%s1191 + $0x10] sm:$0xf]
    %v1197 = vld [vmem:[%s1191 + $0x14] sm:$0xf]
    %v1198 = vld [vmem:[%s1191 + $0x18] sm:$0xf]
    %v1199 = vld [vmem:[%s1191 + $0x1c] sm:$0xf]
    %v1200 = vld [vmem:[%s1191 + $0x20] sm:$0xf]
    %v1201 = vld [vmem:[%s1191 + $0x24] sm:$0xf]
    %v1202 = vld [vmem:[%s1191 + $0x28] sm:$0xf]
    %v1203 = vld [vmem:[%s1191 + $0x2c] sm:$0xf]
    %v1204 = vld [vmem:[%s1191 + $0x30] sm:$0xf]
    %v1205 = vld [vmem:[%s1191 + $0x34] sm:$0xf]
    %v1206 = vld [vmem:[%s1191 + $0x38] sm:$0xf]
    %v1207 = vld [vmem:[%s1191 + $0x3c] sm:$0xf]
    %v1224 = vunpack.c.l.b16 %v1192
    %v1225 = vunpack.c.l.b16 %v1193
    %v1226 = vunpack.c.l.b16 %v1194
    %v1227 = vunpack.c.l.b16 %v1195
    %v1228 = vunpack.c.l.b16 %v1196
    %v1229 = vunpack.c.l.b16 %v1197
    %v1230 = vunpack.c.l.b16 %v1198
    %v1231 = vunpack.c.l.b16 %v1199
    %v1232 = vunpack.c.l.b16 %v1200
    %v1233 = vunpack.c.l.b16 %v1201
    %v1234 = vunpack.c.l.b16 %v1202
    %v1235 = vunpack.c.l.b16 %v1203
    %v1236 = vunpack.c.l.b16 %v1204
    %v1237 = vunpack.c.l.b16 %v1205
    %v1238 = vunpack.c.l.b16 %v1206
    %v1239 = vunpack.c.l.b16 %v1207
    %v1240 = vpack.c.b16 %v1225, %v1224
    %v1241 = vpack.c.b16 %v1227, %v1226
    %v1242 = vpack.c.b16 %v1229, %v1228
    %v1243 = vpack.c.b16 %v1231, %v1230
    %v1244 = vpack.c.b16 %v1233, %v1232
    %v1245 = vpack.c.b16 %v1235, %v1234
    %v1246 = vpack.c.b16 %v1237, %v1236
    %v1247 = vpack.c.b16 %v1239, %v1238
    %1256 = vmatprep.subr.bf16.mxu0 0
    %1257 = vmatpush1.bf16.msra.mxu0 %v1240
    %1258 = vmatprep.subr.bf16.mxu0 0
    %1259 = vmatpush1.bf16.msra.mxu0 %v1241
    %1260 = vmatprep.subr.bf16.mxu0 0
    %1261 = vmatpush1.bf16.msra.mxu0 %v1242
    %1262 = vmatprep.subr.bf16.mxu0 0
    %1263 = vmatpush1.bf16.msra.mxu0 %v1243
    %1264 = vmatprep.subr.bf16.mxu0 0
    %1265 = vmatpush1.bf16.msra.mxu0 %v1244
    %1266 = vmatprep.subr.bf16.mxu0 0
    %1267 = vmatpush1.bf16.msra.mxu0 %v1245
    %1268 = vmatprep.subr.bf16.mxu0 0
    %1269 = vmatpush1.bf16.msra.mxu0 %v1246
    %1270 = vmatprep.subr.bf16.mxu0 0
    %1271 = vmatpush1.bf16.msra.mxu0 %v1247
    %1272 = vmatprep.subr.bf16.mxu0 0
    %1273 = vmatpush1.bf16.msra.mxu0 0
    %1274 = vmatprep.subr.bf16.mxu0 0
    %1275 = vmatpush1.bf16.msra.mxu0 0
    %1276 = vmatprep.subr.bf16.mxu0 0
    %1277 = vmatpush1.bf16.msra.mxu0 0
    %1278 = vmatprep.subr.bf16.mxu0 0
    %1279 = vmatpush1.bf16.msra.mxu0 0
    %1280 = vmatprep.subr.bf16.mxu0 0
    %1281 = vmatpush1.bf16.msra.mxu0 0
    %1282 = vmatprep.subr.bf16.mxu0 0
    %1283 = vmatpush1.bf16.msra.mxu0 0
    %1284 = vmatprep.subr.bf16.mxu0 0
    %1285 = vmatpush1.bf16.msra.mxu0 0
    %1286 = vmatprep.subr.bf16.mxu0 0
    %1287 = vmatpush1.bf16.msra.mxu0 0
    %1288 = vmatprep.mubr.bf16.mxu0 0
    %1289 = vmatmul.mubr.bf16.gmra.mrb[0].mxu0 %v1190
    %v1290 = vpop.f32.mrb[0].mxu0
    %v1291 = vadd.f32 0.0, %v1290
    %v1292 = vpop.f32.mrb[0].mxu0
    %v1293 = vpop.f32.mrb[0].mxu0
    %v1294 = vpop.f32.mrb[0].mxu0
    %1295 = vdwg.mxu0
    %v1312 = vunpack.c.l.b16 %v1129
    %v1313 = vunpack.c.l.b16 %v1130
    %v1314 = vunpack.c.l.b16 %v1131
    %v1315 = vunpack.c.l.b16 %v1132
    %v1316 = vunpack.c.l.b16 %v1133
    %v1317 = vunpack.c.l.b16 %v1134
    %v1318 = vunpack.c.l.b16 %v1135
    %v1319 = vunpack.c.l.b16 %v1136
    %v1320 = vunpack.c.l.b16 %v1137
    %v1321 = vunpack.c.l.b16 %v1138
    %v1322 = vunpack.c.l.b16 %v1139
    %v1323 = vunpack.c.l.b16 %v1140
    %v1324 = vunpack.c.l.b16 %v1141
    %v1325 = vunpack.c.l.b16 %v1142
    %v1326 = vunpack.c.l.b16 %v1143
    %v1327 = vunpack.c.l.b16 %v1144
    %v1328 = vpack.c.b16 %v1313, %v1312
    %v1329 = vpack.c.b16 %v1315, %v1314
    %v1330 = vpack.c.b16 %v1317, %v1316
    %v1331 = vpack.c.b16 %v1319, %v1318
    %v1332 = vpack.c.b16 %v1321, %v1320
    %v1333 = vpack.c.b16 %v1323, %v1322
    %v1334 = vpack.c.b16 %v1325, %v1324
    %v1335 = vpack.c.b16 %v1327, %v1326
    %1344 = vmatprep.subr.bf16.mxu0 0
    %1345 = vmatpush1.bf16.msra.mxu0 %v1328
    %1346 = vmatprep.subr.bf16.mxu0 0
    %1347 = vmatpush1.bf16.msra.mxu0 %v1329
    %1348 = vmatprep.subr.bf16.mxu0 0
    %1349 = vmatpush1.bf16.msra.mxu0 %v1330
    %1350 = vmatprep.subr.bf16.mxu0 0
    %1351 = vmatpush1.bf16.msra.mxu0 %v1331
    %1352 = vmatprep.subr.bf16.mxu0 0
    %1353 = vmatpush1.bf16.msra.mxu0 %v1332
    %1354 = vmatprep.subr.bf16.mxu0 0
    %1355 = vmatpush1.bf16.msra.mxu0 %v1333
    %1356 = vmatprep.subr.bf16.mxu0 0
    %1357 = vmatpush1.bf16.msra.mxu0 %v1334
    %1358 = vmatprep.subr.bf16.mxu0 0
    %1359 = vmatpush1.bf16.msra.mxu0 %v1335
    %1360 = vmatprep.subr.bf16.mxu0 0
    %1361 = vmatpush1.bf16.msra.mxu0 0
    %1362 = vmatprep.subr.bf16.mxu0 0
    %1363 = vmatpush1.bf16.msra.mxu0 0
    %1364 = vmatprep.subr.bf16.mxu0 0
    %1365 = vmatpush1.bf16.msra.mxu0 0
    %1366 = vmatprep.subr.bf16.mxu0 0
    %1367 = vmatpush1.bf16.msra.mxu0 0
    %1368 = vmatprep.subr.bf16.mxu0 0
    %1369 = vmatpush1.bf16.msra.mxu0 0
    %1370 = vmatprep.subr.bf16.mxu0 0
    %1371 = vmatpush1.bf16.msra.mxu0 0
    %1372 = vmatprep.subr.bf16.mxu0 0
    %1373 = vmatpush1.bf16.msra.mxu0 0
    %1374 = vmatprep.subr.bf16.mxu0 0
    %1375 = vmatpush1.bf16.msra.mxu0 0
    %1376 = vmatprep.mubr.bf16.mxu0 0
    %1377 = vmatmul.mubr.bf16.gmra.mrb[0].mxu0 %v1128
    %v1378 = vpop.f32.mrb[0].mxu0
    %v1379 = vadd.f32 %v1291, %v1378
    %v1380 = vpop.f32.mrb[0].mxu0
    %v1381 = vpop.f32.mrb[0].mxu0
    %v1382 = vpop.f32.mrb[0].mxu0
    %1383 = vdwg.mxu0
    %s1384 = scalar_lea.vmem [#allocation10], 4
    %v1385 = vld [vmem:[%s1384] sm:$0x3]
    %v1387 = vsel %vm1080, %v1385, 0
    %1389 = vmatprep.subr.bf16.mxu0 0
    %1390 = vmatpush1.bf16.msra.mxu0 %v1086
    %1391 = vmatprep.subr.bf16.mxu0 0
    %1392 = vmatpush1.bf16.msra.mxu0 0
    %1393 = vmatprep.subr.bf16.mxu0 0
    %1394 = vmatpush1.bf16.msra.mxu0 0
    %1395 = vmatprep.subr.bf16.mxu0 0
    %1396 = vmatpush1.bf16.msra.mxu0 0
    %1397 = vmatprep.subr.bf16.mxu0 0
    %1398 = vmatpush1.bf16.msra.mxu0 0
    %1399 = vmatprep.subr.bf16.mxu0 0
    %1400 = vmatpush1.bf16.msra.mxu0 0
    %1401 = vmatprep.subr.bf16.mxu0 0
    %1402 = vmatpush1.bf16.msra.mxu0 0
    %1403 = vmatprep.subr.bf16.mxu0 0
    %1404 = vmatpush1.bf16.msra.mxu0 0
    %1405 = vmatprep.subr.bf16.mxu0 0
    %1406 = vmatpush1.bf16.msra.mxu0 0
    %1407 = vmatprep.subr.bf16.mxu0 0
    %1408 = vmatpush1.bf16.msra.mxu0 0
    %1409 = vmatprep.subr.bf16.mxu0 0
    %1410 = vmatpush1.bf16.msra.mxu0 0
    %1411 = vmatprep.subr.bf16.mxu0 0
    %1412 = vmatpush1.bf16.msra.mxu0 0
    %1413 = vmatprep.subr.bf16.mxu0 0
    %1414 = vmatpush1.bf16.msra.mxu0 0
    %1415 = vmatprep.subr.bf16.mxu0 0
    %1416 = vmatpush1.bf16.msra.mxu0 0
    %1417 = vmatprep.subr.bf16.mxu0 0
    %1418 = vmatpush1.bf16.msra.mxu0 0
    %1419 = vmatprep.subr.bf16.mxu0 0
    %1420 = vmatpush1.bf16.msra.mxu0 0
    %1421 = vmatprep.mubr.bf16.mxu0 0
    %1422 = vmatmul.mubr.bf16.gmra.mrb[0].mxu0 %v1387
    %v1423 = vpop.f32.mrb[0].mxu0
    %v1424 = vadd.f32 0.0, %v1423
    %v1425 = vpop.f32.mrb[0].mxu0
    %v1426 = vpop.f32.mrb[0].mxu0
    %v1427 = vpop.f32.mrb[0].mxu0
    %1428 = vdwg.mxu0
    %v1429 = vpack.c.bf16 %v1424, %v1424
    %s1430 = scalar_lea.vmem %s8, 128
    %v1431 = vld [vmem:[%s1430] sm:$0xf]
    %v1432 = vld [vmem:[%s1430 + $0x4] sm:$0xf]
    %v1433 = vld [vmem:[%s1430 + $0x8] sm:$0xf]
    %v1434 = vld [vmem:[%s1430 + $0xc] sm:$0xf]
    %v1435 = vld [vmem:[%s1430 + $0x10] sm:$0xf]
    %v1436 = vld [vmem:[%s1430 + $0x14] sm:$0xf]
    %v1437 = vld [vmem:[%s1430 + $0x18] sm:$0xf]
    %v1438 = vld [vmem:[%s1430 + $0x1c] sm:$0xf]
    %v1439 = vld [vmem:[%s1430 + $0x20] sm:$0xf]
    %v1440 = vld [vmem:[%s1430 + $0x24] sm:$0xf]
    %v1441 = vld [vmem:[%s1430 + $0x28] sm:$0xf]
    %v1442 = vld [vmem:[%s1430 + $0x2c] sm:$0xf]
    %v1443 = vld [vmem:[%s1430 + $0x30] sm:$0xf]
    %v1444 = vld [vmem:[%s1430 + $0x34] sm:$0xf]
    %v1445 = vld [vmem:[%s1430 + $0x38] sm:$0xf]
    %v1446 = vld [vmem:[%s1430 + $0x3c] sm:$0xf]
    %v1463 = vunpack.c.l.b16 %v1431
    %v1464 = vunpack.c.l.b16 %v1432
    %v1465 = vunpack.c.l.b16 %v1433
    %v1466 = vunpack.c.l.b16 %v1434
    %v1467 = vunpack.c.l.b16 %v1435
    %v1468 = vunpack.c.l.b16 %v1436
    %v1469 = vunpack.c.l.b16 %v1437
    %v1470 = vunpack.c.l.b16 %v1438
    %v1471 = vunpack.c.l.b16 %v1439
    %v1472 = vunpack.c.l.b16 %v1440
    %v1473 = vunpack.c.l.b16 %v1441
    %v1474 = vunpack.c.l.b16 %v1442
    %v1475 = vunpack.c.l.b16 %v1443
    %v1476 = vunpack.c.l.b16 %v1444
    %v1477 = vunpack.c.l.b16 %v1445
    %v1478 = vunpack.c.l.b16 %v1446
    %v1479 = vpack.c.b16 %v1464, %v1463
    %v1480 = vpack.c.b16 %v1466, %v1465
    %v1481 = vpack.c.b16 %v1468, %v1467
    %v1482 = vpack.c.b16 %v1470, %v1469
    %v1483 = vpack.c.b16 %v1472, %v1471
    %v1484 = vpack.c.b16 %v1474, %v1473
    %v1485 = vpack.c.b16 %v1476, %v1475
    %v1486 = vpack.c.b16 %v1478, %v1477
    %1495 = vmatprep.subr.bf16.mxu0 0
    %1496 = vmatpush1.bf16.msra.mxu0 %v1479
    %1497 = vmatprep.subr.bf16.mxu0 0
    %1498 = vmatpush1.bf16.msra.mxu0 %v1480
    %1499 = vmatprep.subr.bf16.mxu0 0
    %1500 = vmatpush1.bf16.msra.mxu0 %v1481
    %1501 = vmatprep.subr.bf16.mxu0 0
    %1502 = vmatpush1.bf16.msra.mxu0 %v1482
    %1503 = vmatprep.subr.bf16.mxu0 0
    %1504 = vmatpush1.bf16.msra.mxu0 %v1483
    %1505 = vmatprep.subr.bf16.mxu0 0
    %1506 = vmatpush1.bf16.msra.mxu0 %v1484
    %1507 = vmatprep.subr.bf16.mxu0 0
    %1508 = vmatpush1.bf16.msra.mxu0 %v1485
    %1509 = vmatprep.subr.bf16.mxu0 0
    %1510 = vmatpush1.bf16.msra.mxu0 %v1486
    %1511 = vmatprep.subr.bf16.mxu0 0
    %1512 = vmatpush1.bf16.msra.mxu0 0
    %1513 = vmatprep.subr.bf16.mxu0 0
    %1514 = vmatpush1.bf16.msra.mxu0 0
    %1515 = vmatprep.subr.bf16.mxu0 0
    %1516 = vmatpush1.bf16.msra.mxu0 0
    %1517 = vmatprep.subr.bf16.mxu0 0
    %1518 = vmatpush1.bf16.msra.mxu0 0
    %1519 = vmatprep.subr.bf16.mxu0 0
    %1520 = vmatpush1.bf16.msra.mxu0 0
    %1521 = vmatprep.subr.bf16.mxu0 0
    %1522 = vmatpush1.bf16.msra.mxu0 0
    %1523 = vmatprep.subr.bf16.mxu0 0
    %1524 = vmatpush1.bf16.msra.mxu0 0
    %1525 = vmatprep.subr.bf16.mxu0 0
    %1526 = vmatpush1.bf16.msra.mxu0 0
    %1527 = vmatprep.mubr.bf16.mxu0 0
    %1528 = vmatmul.mubr.bf16.gmra.mrb[0].mxu0 %v1429
    %v1529 = vpop.f32.mrb[0].mxu0
    %v1530 = vadd.f32 0.0, %v1529
    %v1531 = vpop.f32.mrb[0].mxu0
    %v1532 = vpop.f32.mrb[0].mxu0
    %v1533 = vpop.f32.mrb[0].mxu0
    %1534 = vdwg.mxu0
    %v1535 = vadd.f32 %v1379, %v1530
    %v1536 = vld [vmem:[#allocation11] sm:$0x1]
    %v1537 = vlaneseq
    %v1538 = vshrl.u32 %v1537, 7
    %v1539 = vsub.s32 0, %v1538
    %v1540 = vrot.slane %v1536, %v1539
    %v1541 = vadd.f32 %v1535, %v1540
    %vm1542 = vcmp.gt.f32.partialorder %v1541, 0.0
    %v1543 = vmul.f32 %v1541, 0.2
    %v1544 = vsel %vm1542, %v1541, %v1543
    %v1545 = vld [vmem:[#allocation11 + $0x1] sm:$0x1]
    %v1546 = vlaneseq
    %v1547 = vshrl.u32 %v1546, 7
    %v1548 = vsub.s32 0, %v1547
    %v1549 = vrot.slane %v1545, %v1548
    %v1550 = vmul.f32 %v1544, %v1549
    %v1551 = vld [vmem:[#allocation11 + $0x2] sm:$0x1]
    %v1552 = vlaneseq
    %v1553 = vshrl.u32 %v1552, 7
    %v1554 = vsub.s32 0, %v1553
    %v1555 = vrot.slane %v1551, %v1554
    %v1556 = vadd.f32 %v1550, %v1555
    %v1557 = vpack.c.bf16 %v1556, %v1556
    %v1558 = vld [vmem:[#allocation13] sm:$0x1]
    %vm1559 = vcmask 31744
    %v1561 = vsel %vm1559, %v1558, 0
    %vm1563 = vcmask 1041408
    %v1565 = vsel %vm1563, %v1557, 0
    %1567 = vmatprep.subr.bf16.mxu0 0
    %1568 = vmatpush1.bf16.msra.mxu0 %v1565
    %1569 = vmatprep.subr.bf16.mxu0 0
    %1570 = vmatpush1.bf16.msra.mxu0 0
    %1571 = vmatprep.subr.bf16.mxu0 0
    %1572 = vmatpush1.bf16.msra.mxu0 0
    %1573 = vmatprep.subr.bf16.mxu0 0
    %1574 = vmatpush1.bf16.msra.mxu0 0
    %1575 = vmatprep.subr.bf16.mxu0 0
    %1576 = vmatpush1.bf16.msra.mxu0 0
    %1577 = vmatprep.subr.bf16.mxu0 0
    %1578 = vmatpush1.bf16.msra.mxu0 0
    %1579 = vmatprep.subr.bf16.mxu0 0
    %1580 = vmatpush1.bf16.msra.mxu0 0
    %1581 = vmatprep.subr.bf16.mxu0 0
    %1582 = vmatpush1.bf16.msra.mxu0 0
    %1583 = vmatprep.subr.bf16.mxu0 0
    %1584 = vmatpush1.bf16.msra.mxu0 0
    %1585 = vmatprep.subr.bf16.mxu0 0
    %1586 = vmatpush1.bf16.msra.mxu0 0
    %1587 = vmatprep.subr.bf16.mxu0 0
    %1588 = vmatpush1.bf16.msra.mxu0 0
    %1589 = vmatprep.subr.bf16.mxu0 0
    %1590 = vmatpush1.bf16.msra.mxu0 0
    %1591 = vmatprep.subr.bf16.mxu0 0
    %1592 = vmatpush1.bf16.msra.mxu0 0
    %1593 = vmatprep.subr.bf16.mxu0 0
    %1594 = vmatpush1.bf16.msra.mxu0 0
    %1595 = vmatprep.subr.bf16.mxu0 0
    %1596 = vmatpush1.bf16.msra.mxu0 0
    %1597 = vmatprep.subr.bf16.mxu0 0
    %1598 = vmatpush1.bf16.msra.mxu0 0
    %1599 = vmatprep.mubr.bf16.mxu0 0
    %1600 = vmatmul.mubr.bf16.gmra.mrb[0].mxu0 %v1561
    %v1601 = vpop.f32.mrb[0].mxu0
    %v1602 = vadd.f32 0.0, %v1601
    %v1603 = vpop.f32.mrb[0].mxu0
    %v1604 = vpop.f32.mrb[0].mxu0
    %v1605 = vpop.f32.mrb[0].mxu0
    %1606 = vdwg.mxu0
    %v1607 = vpack.c.bf16 %v1602, %v1602
    %v1608 = vld [vmem:[%s11] sm:$0xf]
    %v1609 = vld [vmem:[%s11 + $0x4] sm:$0xf]
    %v1610 = vld [vmem:[%s11 + $0x8] sm:$0xf]
    %v1611 = vld [vmem:[%s11 + $0xc] sm:$0xf]
    %v1612 = vld [vmem:[%s11 + $0x10] sm:$0xf]
    %v1613 = vld [vmem:[%s11 + $0x14] sm:$0xf]
    %v1614 = vld [vmem:[%s11 + $0x18] sm:$0xf]
    %v1615 = vld [vmem:[%s11 + $0x1c] sm:$0xf]
    %v1616 = vld [vmem:[%s11 + $0x20] sm:$0xf]
    %v1617 = vld [vmem:[%s11 + $0x24] sm:$0xf]
    %v1618 = vld [vmem:[%s11 + $0x28] sm:$0xf]
    %v1619 = vld [vmem:[%s11 + $0x2c] sm:$0xf]
    %v1620 = vld [vmem:[%s11 + $0x30] sm:$0xf]
    %v1621 = vld [vmem:[%s11 + $0x34] sm:$0xf]
    %v1622 = vld [vmem:[%s11 + $0x38] sm:$0xf]
    %v1623 = vld [vmem:[%s11 + $0x3c] sm:$0xf]
    %s1624 = scalar_lea.vmem [#allocation13], 1
    %v1625 = vld [vmem:[%s1624] sm:$0x1]
    %v1627 = vsel %vm1559, %v1625, 0
    %1629 = vmatprep.subr.bf16.mxu0 0
    %1630 = vmatpush1.bf16.msra.mxu0 %v1565
    %1631 = vmatprep.subr.bf16.mxu0 0
    %1632 = vmatpush1.bf16.msra.mxu0 0
    %1633 = vmatprep.subr.bf16.mxu0 0
    %1634 = vmatpush1.bf16.msra.mxu0 0
    %1635 = vmatprep.subr.bf16.mxu0 0
    %1636 = vmatpush1.bf16.msra.mxu0 0
    %1637 = vmatprep.subr.bf16.mxu0 0
    %1638 = vmatpush1.bf16.msra.mxu0 0
    %1639 = vmatprep.subr.bf16.mxu0 0
    %1640 = vmatpush1.bf16.msra.mxu0 0
    %1641 = vmatprep.subr.bf16.mxu0 0
    %1642 = vmatpush1.bf16.msra.mxu0 0
    %1643 = vmatprep.subr.bf16.mxu0 0
    %1644 = vmatpush1.bf16.msra.mxu0 0
    %1645 = vmatprep.subr.bf16.mxu0 0
    %1646 = vmatpush1.bf16.msra.mxu0 0
    %1647 = vmatprep.subr.bf16.mxu0 0
    %1648 = vmatpush1.bf16.msra.mxu0 0
    %1649 = vmatprep.subr.bf16.mxu0 0
    %1650 = vmatpush1.bf16.msra.mxu0 0
    %1651 = vmatprep.subr.bf16.mxu0 0
    %1652 = vmatpush1.bf16.msra.mxu0 0
    %1653 = vmatprep.subr.bf16.mxu0 0
    %1654 = vmatpush1.bf16.msra.mxu0 0
    %1655 = vmatprep.subr.bf16.mxu0 0
    %1656 = vmatpush1.bf16.msra.mxu0 0
    %1657 = vmatprep.subr.bf16.mxu0 0
    %1658 = vmatpush1.bf16.msra.mxu0 0
    %1659 = vmatprep.subr.bf16.mxu0 0
    %1660 = vmatpush1.bf16.msra.mxu0 0
    %1661 = vmatprep.mubr.bf16.mxu0 0
    %1662 = vmatmul.mubr.bf16.gmra.mrb[0].mxu0 %v1627
    %v1663 = vpop.f32.mrb[0].mxu0
    %v1664 = vadd.f32 0.0, %v1663
    %v1665 = vpop.f32.mrb[0].mxu0
    %v1666 = vpop.f32.mrb[0].mxu0
    %v1667 = vpop.f32.mrb[0].mxu0
    %1668 = vdwg.mxu0
    %v1669 = vpack.c.bf16 %v1664, %v1664
    %s1670 = scalar_lea.vmem %s11, 64
    %v1671 = vld [vmem:[%s1670] sm:$0xf]
    %v1672 = vld [vmem:[%s1670 + $0x4] sm:$0xf]
    %v1673 = vld [vmem:[%s1670 + $0x8] sm:$0xf]
    %v1674 = vld [vmem:[%s1670 + $0xc] sm:$0xf]
    %v1675 = vld [vmem:[%s1670 + $0x10] sm:$0xf]
    %v1676 = vld [vmem:[%s1670 + $0x14] sm:$0xf]
    %v1677 = vld [vmem:[%s1670 + $0x18] sm:$0xf]
    %v1678 = vld [vmem:[%s1670 + $0x1c] sm:$0xf]
    %v1679 = vld [vmem:[%s1670 + $0x20] sm:$0xf]
    %v1680 = vld [vmem:[%s1670 + $0x24] sm:$0xf]
    %v1681 = vld [vmem:[%s1670 + $0x28] sm:$0xf]
    %v1682 = vld [vmem:[%s1670 + $0x2c] sm:$0xf]
    %v1683 = vld [vmem:[%s1670 + $0x30] sm:$0xf]
    %v1684 = vld [vmem:[%s1670 + $0x34] sm:$0xf]
    %v1685 = vld [vmem:[%s1670 + $0x38] sm:$0xf]
    %v1686 = vld [vmem:[%s1670 + $0x3c] sm:$0xf]
    %v1703 = vunpack.c.l.b16 %v1671
    %v1704 = vunpack.c.l.b16 %v1672
    %v1705 = vunpack.c.l.b16 %v1673
    %v1706 = vunpack.c.l.b16 %v1674
    %v1707 = vunpack.c.l.b16 %v1675
    %v1708 = vunpack.c.l.b16 %v1676
    %v1709 = vunpack.c.l.b16 %v1677
    %v1710 = vunpack.c.l.b16 %v1678
    %v1711 = vunpack.c.l.b16 %v1679
    %v1712 = vunpack.c.l.b16 %v1680
    %v1713 = vunpack.c.l.b16 %v1681
    %v1714 = vunpack.c.l.b16 %v1682
    %v1715 = vunpack.c.l.b16 %v1683
    %v1716 = vunpack.c.l.b16 %v1684
    %v1717 = vunpack.c.l.b16 %v1685
    %v1718 = vunpack.c.l.b16 %v1686
    %v1719 = vpack.c.b16 %v1704, %v1703
    %v1720 = vpack.c.b16 %v1706, %v1705
    %v1721 = vpack.c.b16 %v1708, %v1707
    %v1722 = vpack.c.b16 %v1710, %v1709
    %v1723 = vpack.c.b16 %v1712, %v1711
    %v1724 = vpack.c.b16 %v1714, %v1713
    %v1725 = vpack.c.b16 %v1716, %v1715
    %v1726 = vpack.c.b16 %v1718, %v1717
    %1735 = vmatprep.subr.bf16.mxu0 0
    %1736 = vmatpush1.bf16.msra.mxu0 %v1719
    %1737 = vmatprep.subr.bf16.mxu0 0
    %1738 = vmatpush1.bf16.msra.mxu0 %v1720
    %1739 = vmatprep.subr.bf16.mxu0 0
    %1740 = vmatpush1.bf16.msra.mxu0 %v1721
    %1741 = vmatprep.subr.bf16.mxu0 0
    %1742 = vmatpush1.bf16.msra.mxu0 %v1722
    %1743 = vmatprep.subr.bf16.mxu0 0
    %1744 = vmatpush1.bf16.msra.mxu0 %v1723
    %1745 = vmatprep.subr.bf16.mxu0 0
    %1746 = vmatpush1.bf16.msra.mxu0 %v1724
    %1747 = vmatprep.subr.bf16.mxu0 0
    %1748 = vmatpush1.bf16.msra.mxu0 %v1725
    %1749 = vmatprep.subr.bf16.mxu0 0
    %1750 = vmatpush1.bf16.msra.mxu0 %v1726
    %1751 = vmatprep.subr.bf16.mxu0 0
    %1752 = vmatpush1.bf16.msra.mxu0 0
    %1753 = vmatprep.subr.bf16.mxu0 0
    %1754 = vmatpush1.bf16.msra.mxu0 0
    %1755 = vmatprep.subr.bf16.mxu0 0
    %1756 = vmatpush1.bf16.msra.mxu0 0
    %1757 = vmatprep.subr.bf16.mxu0 0
    %1758 = vmatpush1.bf16.msra.mxu0 0
    %1759 = vmatprep.subr.bf16.mxu0 0
    %1760 = vmatpush1.bf16.msra.mxu0 0
    %1761 = vmatprep.subr.bf16.mxu0 0
    %1762 = vmatpush1.bf16.msra.mxu0 0
    %1763 = vmatprep.subr.bf16.mxu0 0
    %1764 = vmatpush1.bf16.msra.mxu0 0
    %1765 = vmatprep.subr.bf16.mxu0 0
    %1766 = vmatpush1.bf16.msra.mxu0 0
    %1767 = vmatprep.mubr.bf16.mxu0 0
    %1768 = vmatmul.mubr.bf16.gmra.mrb[0].mxu0 %v1669
    %v1769 = vpop.f32.mrb[0].mxu0
    %v1770 = vadd.f32 0.0, %v1769
    %v1771 = vpop.f32.mrb[0].mxu0
    %v1772 = vpop.f32.mrb[0].mxu0
    %v1773 = vpop.f32.mrb[0].mxu0
    %1774 = vdwg.mxu0
    %v1791 = vunpack.c.l.b16 %v1608
    %v1792 = vunpack.c.l.b16 %v1609
    %v1793 = vunpack.c.l.b16 %v1610
    %v1794 = vunpack.c.l.b16 %v1611
    %v1795 = vunpack.c.l.b16 %v1612
    %v1796 = vunpack.c.l.b16 %v1613
    %v1797 = vunpack.c.l.b16 %v1614
    %v1798 = vunpack.c.l.b16 %v1615
    %v1799 = vunpack.c.l.b16 %v1616
    %v1800 = vunpack.c.l.b16 %v1617
    %v1801 = vunpack.c.l.b16 %v1618
    %v1802 = vunpack.c.l.b16 %v1619
    %v1803 = vunpack.c.l.b16 %v1620
    %v1804 = vunpack.c.l.b16 %v1621
    %v1805 = vunpack.c.l.b16 %v1622
    %v1806 = vunpack.c.l.b16 %v1623
    %v1807 = vpack.c.b16 %v1792, %v1791
    %v1808 = vpack.c.b16 %v1794, %v1793
    %v1809 = vpack.c.b16 %v1796, %v1795
    %v1810 = vpack.c.b16 %v1798, %v1797
    %v1811 = vpack.c.b16 %v1800, %v1799
    %v1812 = vpack.c.b16 %v1802, %v1801
    %v1813 = vpack.c.b16 %v1804, %v1803
    %v1814 = vpack.c.b16 %v1806, %v1805
    %1823 = vmatprep.subr.bf16.mxu0 0
    %1824 = vmatpush1.bf16.msra.mxu0 %v1807
    %1825 = vmatprep.subr.bf16.mxu0 0
    %1826 = vmatpush1.bf16.msra.mxu0 %v1808
    %1827 = vmatprep.subr.bf16.mxu0 0
    %1828 = vmatpush1.bf16.msra.mxu0 %v1809
    %1829 = vmatprep.subr.bf16.mxu0 0
    %1830 = vmatpush1.bf16.msra.mxu0 %v1810
    %1831 = vmatprep.subr.bf16.mxu0 0
    %1832 = vmatpush1.bf16.msra.mxu0 %v1811
    %1833 = vmatprep.subr.bf16.mxu0 0
    %1834 = vmatpush1.bf16.msra.mxu0 %v1812
    %1835 = vmatprep.subr.bf16.mxu0 0
    %1836 = vmatpush1.bf16.msra.mxu0 %v1813
    %1837 = vmatprep.subr.bf16.mxu0 0
    %1838 = vmatpush1.bf16.msra.mxu0 %v1814
    %1839 = vmatprep.subr.bf16.mxu0 0
    %1840 = vmatpush1.bf16.msra.mxu0 0
    %1841 = vmatprep.subr.bf16.mxu0 0
    %1842 = vmatpush1.bf16.msra.mxu0 0
    %1843 = vmatprep.subr.bf16.mxu0 0
    %1844 = vmatpush1.bf16.msra.mxu0 0
    %1845 = vmatprep.subr.bf16.mxu0 0
    %1846 = vmatpush1.bf16.msra.mxu0 0
    %1847 = vmatprep.subr.bf16.mxu0 0
    %1848 = vmatpush1.bf16.msra.mxu0 0
    %1849 = vmatprep.subr.bf16.mxu0 0
    %1850 = vmatpush1.bf16.msra.mxu0 0
    %1851 = vmatprep.subr.bf16.mxu0 0
    %1852 = vmatpush1.bf16.msra.mxu0 0
    %1853 = vmatprep.subr.bf16.mxu0 0
    %1854 = vmatpush1.bf16.msra.mxu0 0
    %1855 = vmatprep.mubr.bf16.mxu0 0
    %1856 = vmatmul.mubr.bf16.gmra.mrb[0].mxu0 %v1607
    %v1857 = vpop.f32.mrb[0].mxu0
    %v1858 = vadd.f32 %v1770, %v1857
    %v1859 = vpop.f32.mrb[0].mxu0
    %v1860 = vpop.f32.mrb[0].mxu0
    %v1861 = vpop.f32.mrb[0].mxu0
    %1862 = vdwg.mxu0
    %s1863 = scalar_lea.vmem [#allocation13], 2
    %v1864 = vld [vmem:[%s1863] sm:$0x1]
    %v1866 = vsel %vm1559, %v1864, 0
    %1868 = vmatprep.subr.bf16.mxu0 0
    %1869 = vmatpush1.bf16.msra.mxu0 %v1565
    %1870 = vmatprep.subr.bf16.mxu0 0
    %1871 = vmatpush1.bf16.msra.mxu0 0
    %1872 = vmatprep.subr.bf16.mxu0 0
    %1873 = vmatpush1.bf16.msra.mxu0 0
    %1874 = vmatprep.subr.bf16.mxu0 0
    %1875 = vmatpush1.bf16.msra.mxu0 0
    %1876 = vmatprep.subr.bf16.mxu0 0
    %1877 = vmatpush1.bf16.msra.mxu0 0
    %1878 = vmatprep.subr.bf16.mxu0 0
    %1879 = vmatpush1.bf16.msra.mxu0 0
    %1880 = vmatprep.subr.bf16.mxu0 0
    %1881 = vmatpush1.bf16.msra.mxu0 0
    %1882 = vmatprep.subr.bf16.mxu0 0
    %1883 = vmatpush1.bf16.msra.mxu0 0
    %1884 = vmatprep.subr.bf16.mxu0 0
    %1885 = vmatpush1.bf16.msra.mxu0 0
    %1886 = vmatprep.subr.bf16.mxu0 0
    %1887 = vmatpush1.bf16.msra.mxu0 0
    %1888 = vmatprep.subr.bf16.mxu0 0
    %1889 = vmatpush1.bf16.msra.mxu0 0
    %1890 = vmatprep.subr.bf16.mxu0 0
    %1891 = vmatpush1.bf16.msra.mxu0 0
    %1892 = vmatprep.subr.bf16.mxu0 0
    %1893 = vmatpush1.bf16.msra.mxu0 0
    %1894 = vmatprep.subr.bf16.mxu0 0
    %1895 = vmatpush1.bf16.msra.mxu0 0
    %1896 = vmatprep.subr.bf16.mxu0 0
    %1897 = vmatpush1.bf16.msra.mxu0 0
    %1898 = vmatprep.subr.bf16.mxu0 0
    %1899 = vmatpush1.bf16.msra.mxu0 0
    %1900 = vmatprep.mubr.bf16.mxu0 0
    %1901 = vmatmul.mubr.bf16.gmra.mrb[0].mxu0 %v1866
    %v1902 = vpop.f32.mrb[0].mxu0
    %v1903 = vadd.f32 0.0, %v1902
    %v1904 = vpop.f32.mrb[0].mxu0
    %v1905 = vpop.f32.mrb[0].mxu0
    %v1906 = vpop.f32.mrb[0].mxu0
    %1907 = vdwg.mxu0
    %v1908 = vpack.c.bf16 %v1903, %v1903
    %s1909 = scalar_lea.vmem %s11, 128
    %v1910 = vld [vmem:[%s1909] sm:$0xf]
    %v1911 = vld [vmem:[%s1909 + $0x4] sm:$0xf]
    %v1912 = vld [vmem:[%s1909 + $0x8] sm:$0xf]
    %v1913 = vld [vmem:[%s1909 + $0xc] sm:$0xf]
    %v1914 = vld [vmem:[%s1909 + $0x10] sm:$0xf]
    %v1915 = vld [vmem:[%s1909 + $0x14] sm:$0xf]
    %v1916 = vld [vmem:[%s1909 + $0x18] sm:$0xf]
    %v1917 = vld [vmem:[%s1909 + $0x1c] sm:$0xf]
    %v1918 = vld [vmem:[%s1909 + $0x20] sm:$0xf]
    %v1919 = vld [vmem:[%s1909 + $0x24] sm:$0xf]
    %v1920 = vld [vmem:[%s1909 + $0x28] sm:$0xf]
    %v1921 = vld [vmem:[%s1909 + $0x2c] sm:$0xf]
    %v1922 = vld [vmem:[%s1909 + $0x30] sm:$0xf]
    %v1923 = vld [vmem:[%s1909 + $0x34] sm:$0xf]
    %v1924 = vld [vmem:[%s1909 + $0x38] sm:$0xf]
    %v1925 = vld [vmem:[%s1909 + $0x3c] sm:$0xf]
    %v1942 = vunpack.c.l.b16 %v1910
    %v1943 = vunpack.c.l.b16 %v1911
    %v1944 = vunpack.c.l.b16 %v1912
    %v1945 = vunpack.c.l.b16 %v1913
    %v1946 = vunpack.c.l.b16 %v1914
    %v1947 = vunpack.c.l.b16 %v1915
    %v1948 = vunpack.c.l.b16 %v1916
    %v1949 = vunpack.c.l.b16 %v1917
    %v1950 = vunpack.c.l.b16 %v1918
    %v1951 = vunpack.c.l.b16 %v1919
    %v1952 = vunpack.c.l.b16 %v1920
    %v1953 = vunpack.c.l.b16 %v1921
    %v1954 = vunpack.c.l.b16 %v1922
    %v1955 = vunpack.c.l.b16 %v1923
    %v1956 = vunpack.c.l.b16 %v1924
    %v1957 = vunpack.c.l.b16 %v1925
    %v1958 = vpack.c.b16 %v1943, %v1942
    %v1959 = vpack.c.b16 %v1945, %v1944
    %v1960 = vpack.c.b16 %v1947, %v1946
    %v1961 = vpack.c.b16 %v1949, %v1948
    %v1962 = vpack.c.b16 %v1951, %v1950
    %v1963 = vpack.c.b16 %v1953, %v1952
    %v1964 = vpack.c.b16 %v1955, %v1954
    %v1965 = vpack.c.b16 %v1957, %v1956
    %1974 = vmatprep.subr.bf16.mxu0 0
    %1975 = vmatpush1.bf16.msra.mxu0 %v1958
    %1976 = vmatprep.subr.bf16.mxu0 0
    %1977 = vmatpush1.bf16.msra.mxu0 %v1959
    %1978 = vmatprep.subr.bf16.mxu0 0
    %1979 = vmatpush1.bf16.msra.mxu0 %v1960
    %1980 = vmatprep.subr.bf16.mxu0 0
    %1981 = vmatpush1.bf16.msra.mxu0 %v1961
    %1982 = vmatprep.subr.bf16.mxu0 0
    %1983 = vmatpush1.bf16.msra.mxu0 %v1962
    %1984 = vmatprep.subr.bf16.mxu0 0
    %1985 = vmatpush1.bf16.msra.mxu0 %v1963
    %1986 = vmatprep.subr.bf16.mxu0 0
    %1987 = vmatpush1.bf16.msra.mxu0 %v1964
    %1988 = vmatprep.subr.bf16.mxu0 0
    %1989 = vmatpush1.bf16.msra.mxu0 %v1965
    %1990 = vmatprep.subr.bf16.mxu0 0
    %1991 = vmatpush1.bf16.msra.mxu0 0
    %1992 = vmatprep.subr.bf16.mxu0 0
    %1993 = vmatpush1.bf16.msra.mxu0 0
    %1994 = vmatprep.subr.bf16.mxu0 0
    %1995 = vmatpush1.bf16.msra.mxu0 0
    %1996 = vmatprep.subr.bf16.mxu0 0
    %1997 = vmatpush1.bf16.msra.mxu0 0
    %1998 = vmatprep.subr.bf16.mxu0 0
    %1999 = vmatpush1.bf16.msra.mxu0 0
    %2000 = vmatprep.subr.bf16.mxu0 0
    %2001 = vmatpush1.bf16.msra.mxu0 0
    %2002 = vmatprep.subr.bf16.mxu0 0
    %2003 = vmatpush1.bf16.msra.mxu0 0
    %2004 = vmatprep.subr.bf16.mxu0 0
    %2005 = vmatpush1.bf16.msra.mxu0 0
    %2006 = vmatprep.mubr.bf16.mxu0 0
    %2007 = vmatmul.mubr.bf16.gmra.mrb[0].mxu0 %v1908
    %v2008 = vpop.f32.mrb[0].mxu0
    %v2009 = vadd.f32 0.0, %v2008
    %v2010 = vpop.f32.mrb[0].mxu0
    %v2011 = vpop.f32.mrb[0].mxu0
    %v2012 = vpop.f32.mrb[0].mxu0
    %2013 = vdwg.mxu0
    %v2014 = vadd.f32 %v1858, %v2009
    %v2015 = vld [vmem:[#allocation14] sm:$0x1]
    %v2016 = vlaneseq
    %v2017 = vshrl.u32 %v2016, 7
    %v2018 = vsub.s32 0, %v2017
    %v2019 = vrot.slane %v2015, %v2018
    %v2020 = vadd.f32 %v2014, %v2019
    %vm2021 = vcmp.gt.f32.partialorder %v2020, 0.0
    %v2022 = vmul.f32 %v2020, 0.2
    %v2023 = vsel %vm2021, %v2020, %v2022
    %v2024 = vld [vmem:[#allocation14 + $0x1] sm:$0x1]
    %v2025 = vlaneseq
    %v2026 = vshrl.u32 %v2025, 7
    %v2027 = vsub.s32 0, %v2026
    %v2028 = vrot.slane %v2024, %v2027
    %v2029 = vmul.f32 %v2023, %v2028
    %v2030 = vld [vmem:[#allocation14 + $0x2] sm:$0x1]
    %v2031 = vlaneseq
    %v2032 = vshrl.u32 %v2031, 7
    %v2033 = vsub.s32 0, %v2032
    %v2034 = vrot.slane %v2030, %v2033
    %v2035 = vadd.f32 %v2029, %v2034
    %v2036 = vpack.c.bf16 %v2035, %v2035
    %v2037 = vld [vmem:[%s13] sm:$0xf]
    %v2038 = vld [vmem:[%s13 + $0x4] sm:$0xf]
    %v2039 = vld [vmem:[%s13 + $0x8] sm:$0xf]
    %v2040 = vld [vmem:[%s13 + $0xc] sm:$0xf]
    %v2041 = vld [vmem:[%s13 + $0x10] sm:$0xf]
    %v2042 = vld [vmem:[%s13 + $0x14] sm:$0xf]
    %v2043 = vld [vmem:[%s13 + $0x18] sm:$0xf]
    %v2044 = vld [vmem:[%s13 + $0x1c] sm:$0xf]
    %v2045 = vld [vmem:[%s13 + $0x20] sm:$0xf]
    %v2046 = vld [vmem:[%s13 + $0x24] sm:$0xf]
    %v2047 = vld [vmem:[%s13 + $0x28] sm:$0xf]
    %v2048 = vld [vmem:[%s13 + $0x2c] sm:$0xf]
    %v2049 = vld [vmem:[%s13 + $0x30] sm:$0xf]
    %v2050 = vld [vmem:[%s13 + $0x34] sm:$0xf]
    %v2051 = vld [vmem:[%s13 + $0x38] sm:$0xf]
    %v2052 = vld [vmem:[%s13 + $0x3c] sm:$0xf]
    %v2053 = vld [vmem:[#allocation16] sm:$0x1]
    %v2055 = vlaneseq
    %v2056 = vshrl.u32 %v2055, 7
    %v2057 = vsub.s32 0, %v2056
    %v2058 = vrot.slane %v2053, %v2057
    %v2076 = vunpack.c.l.b16 %v2037
    %v2077 = vunpack.c.l.b16 %v2038
    %v2078 = vunpack.c.l.b16 %v2039
    %v2079 = vunpack.c.l.b16 %v2040
    %v2080 = vunpack.c.l.b16 %v2041
    %v2081 = vunpack.c.l.b16 %v2042
    %v2082 = vunpack.c.l.b16 %v2043
    %v2083 = vunpack.c.l.b16 %v2044
    %v2084 = vunpack.c.l.b16 %v2045
    %v2085 = vunpack.c.l.b16 %v2046
    %v2086 = vunpack.c.l.b16 %v2047
    %v2087 = vunpack.c.l.b16 %v2048
    %v2088 = vunpack.c.l.b16 %v2049
    %v2089 = vunpack.c.l.b16 %v2050
    %v2090 = vunpack.c.l.b16 %v2051
    %v2091 = vunpack.c.l.b16 %v2052
    %v2092 = vpack.c.b16 %v2077, %v2076
    %v2093 = vpack.c.b16 %v2079, %v2078
    %v2094 = vpack.c.b16 %v2081, %v2080
    %v2095 = vpack.c.b16 %v2083, %v2082
    %v2096 = vpack.c.b16 %v2085, %v2084
    %v2097 = vpack.c.b16 %v2087, %v2086
    %v2098 = vpack.c.b16 %v2089, %v2088
    %v2099 = vpack.c.b16 %v2091, %v2090
    %2108 = vmatprep.subr.bf16.mxu0 0
    %2109 = vmatpush1.bf16.msra.mxu0 %v2092
    %2110 = vmatprep.subr.bf16.mxu0 0
    %2111 = vmatpush1.bf16.msra.mxu0 %v2093
    %2112 = vmatprep.subr.bf16.mxu0 0
    %2113 = vmatpush1.bf16.msra.mxu0 %v2094
    %2114 = vmatprep.subr.bf16.mxu0 0
    %2115 = vmatpush1.bf16.msra.mxu0 %v2095
    %2116 = vmatprep.subr.bf16.mxu0 0
    %2117 = vmatpush1.bf16.msra.mxu0 %v2096
    %2118 = vmatprep.subr.bf16.mxu0 0
    %2119 = vmatpush1.bf16.msra.mxu0 %v2097
    %2120 = vmatprep.subr.bf16.mxu0 0
    %2121 = vmatpush1.bf16.msra.mxu0 %v2098
    %2122 = vmatprep.subr.bf16.mxu0 0
    %2123 = vmatpush1.bf16.msra.mxu0 %v2099
    %2124 = vmatprep.subr.bf16.mxu0 0
    %2125 = vmatpush1.bf16.msra.mxu0 0
    %2126 = vmatprep.subr.bf16.mxu0 0
    %2127 = vmatpush1.bf16.msra.mxu0 0
    %2128 = vmatprep.subr.bf16.mxu0 0
    %2129 = vmatpush1.bf16.msra.mxu0 0
    %2130 = vmatprep.subr.bf16.mxu0 0
    %2131 = vmatpush1.bf16.msra.mxu0 0
    %2132 = vmatprep.subr.bf16.mxu0 0
    %2133 = vmatpush1.bf16.msra.mxu0 0
    %2134 = vmatprep.subr.bf16.mxu0 0
    %2135 = vmatpush1.bf16.msra.mxu0 0
    %2136 = vmatprep.subr.bf16.mxu0 0
    %2137 = vmatpush1.bf16.msra.mxu0 0
    %2138 = vmatprep.subr.bf16.mxu0 0
    %2139 = vmatpush1.bf16.msra.mxu0 0
    %2140 = vmatprep.mubr.bf16.mxu0 0
    %2141 = vmatmul.mubr.bf16.gmra.mrb[0].mxu0 %v2036
    %v2142 = vpop.f32.mrb[0].mxu0
    %v2143 = vadd.f32 %v2058, %v2142
    %v2144 = vpop.f32.mrb[0].mxu0
    %v2145 = vpop.f32.mrb[0].mxu0
    %v2146 = vpop.f32.mrb[0].mxu0
    %2147 = vdwg.mxu0
    %v2148 = vsub.f32 0.0, %v2143
    %v2149 = vmul.f32 %v2148, 1.442695
    %v2150 = vpow.pop %v2149
    %v2151 = vadd.f32 %v2150, 1.0
    %v2152 = vrcp.pop %v2151
    %vm2153 = vcmask 1024
    %2154 = vst.msk [vmem:[%s15] sm:$0x3] %vm2153, %v2152
    %2156 = vrot.lane.b32.xlu0 %v2143, 127
    %v2157 = vpop.permute.xlu0 %2156
    %vm2159 = vcmask 115712
    %2160 = vst.msk [vmem:[#allocation17] sm:$0x3] %vm2159, %v2157
    // Predicated region
    $region98: #{discriminator_forward.1} parent=1 // pred_check
      _
    $region99: #{discriminator_forward.1} parent=1 // pred_check_branch
      %2162 = sbr.rel (0) target = $region101
    $region100: #{discriminator_forward.1} parent=1 // pred_region
      _
    $region101: #{discriminator_forward.1} parent=1 // pred_fallthru
      _
    // Predicated region
    $region102: #{discriminator_forward.1} parent=1 // pred_check
      _
    $region103: #{discriminator_forward.1} parent=1 // pred_check_branch
      %2164 = sbr.rel (0) target = $region105
    $region104: #{discriminator_forward.1} parent=1 // pred_region
      %s2166 = ssub.s32 32, 32
      %2167 = vsyncadd [#allocation4], %s2166
      %s2169 = sshll.u32 [#allocation17], 4
      %s2170 = int_to_ptr.vmem [resolvable:$true] %s2169
      %2172 = dma.vmem_to_hbm [thread:$0]  %s2170, 32, %s16, [#allocation4]
    $region105: #{discriminator_forward.1} parent=1 // pred_fallthru
      _
    // Predicated region
    $region106: #{discriminator_forward.1} parent=1 // pred_check
      _
    $region107: #{discriminator_forward.1} parent=1 // pred_check_branch
      %2174 = sbr.rel (0) target = $region109
    $region108: #{discriminator_forward.1} parent=1 // pred_region
      _
    $region109: #{discriminator_forward.1} parent=1 // pred_fallthru
      _
    // Predicated region
    $region110: #{discriminator_forward.1} parent=1 // pred_check
      _
    $region111: #{discriminator_forward.1} parent=1 // pred_check_branch
      %2176 = sbr.rel (0) target = $region113
    $region112: #{discriminator_forward.1} parent=1 // pred_region
      %2177 = dma.done [#allocation4], 32
    $region113: #{discriminator_forward.1} parent=1 // pred_fallthru
      _
    %2178 = vsyncpa [#allocation3], 1
    %2179 = vsyncpa [#allocation6], 1
    %2180 = vsyncpa [#allocation9], 1
    %2181 = vsyncpa [#allocation12], 1
    %2182 = vsyncpa [#allocation15], 1
    %2183 = vsyncpa [#allocation4], 1

</llo_original>
